<compile_context>
chip_gen: v5e
topology: v5e:2x2
jax: 0.10.0
libtpu: 0.0.40
codegen_flags: <defaults>
</compile_context>

<pallas_src>
import functools

import jax
import jax.numpy as jnp
from jax.experimental import pallas as pl
from jax.experimental.pallas import tpu as pltpu


def _convlstm_cell_kernel(p_ref, w_ref, c_ref, h_out_ref, c_out_ref, acc_ref,
                          *, HD, lane_chunk):
    """Fused ConvLSTM cell: one MXU matmul + lane-chunked gate math.

    p_ref:   (K_pad, BM) bf16   im2col patches^T (row K is the folded-bias 1s row)
    w_ref:   (COUT, K_pad) bf16 flattened conv weight (bias folded into column K)
    c_ref:   (HD, BM)  f32      current cell state, (channels, batch*H*W) layout
    h_out_ref, c_out_ref: (HD, BM)
    acc_ref: (COUT, BM) f32     VMEM scratch for the pre-activation gates
    """
    # Single MXU matmul, f32 accumulation, staged in VMEM (not in vregs).
    acc_ref[...] = jnp.dot(w_ref[...], p_ref[...],
                           preferred_element_type=jnp.float32)

    n_chunks = acc_ref.shape[1] // lane_chunk

    def gate_body(j, carry):
        col = pl.multiple_of(j * lane_chunk, lane_chunk)
        sl = pl.ds(col, lane_chunk)
        # Sublane-aligned gate slices (HD multiple of 8); ordering retires
        # intermediates early to keep per-chunk vreg pressure low.
        g = jnp.tanh(acc_ref[3 * HD:4 * HD, sl])
        i = jax.nn.sigmoid(acc_ref[0 * HD:1 * HD, sl])
        ig = i * g
        f = jax.nn.sigmoid(acc_ref[1 * HD:2 * HD, sl])
        c_next = f * c_ref[:, sl].astype(jnp.float32) + ig
        c_out_ref[:, sl] = c_next.astype(c_out_ref.dtype)
        o = jax.nn.sigmoid(acc_ref[2 * HD:3 * HD, sl])
        h_out_ref[:, sl] = (o * jnp.tanh(c_next)).astype(h_out_ref.dtype)
        return carry

    jax.lax.fori_loop(0, n_chunks, gate_body, 0, unroll=True)


def prepack_conv_weight(weight_oihw, bias):
    """OIHW conv weight -> (COUT, K_pad) bf16 with the bias folded into column K.

    For a recurrent loop / scan, call this ONCE and pass the result to
    convlstm_cell_forward_packed at every timestep (avoids re-running the
    transpose/pad/cast as separate XLA ops each step).
    """
    COUT, CIN, KH, KW = weight_oihw.shape
    K = KH * KW * CIN
    K_pad = ((K + 1 + 127) // 128) * 128          # +1 row reserved for the bias
    # OIHW -> (COUT, KH, KW, CIN) -> (COUT, K); K index order = (kh, kw, cin).
    w_flat = jnp.transpose(weight_oihw, (0, 2, 3, 1)).reshape(COUT, K)
    w_pad = jnp.zeros((COUT, K_pad), jnp.float32)
    w_pad = w_pad.at[:, :K].set(w_flat)
    w_pad = w_pad.at[:, K].set(bias)              # bias rides the contraction
    return w_pad.astype(jnp.bfloat16)


def convlstm_cell_forward_packed(x_nchw, h_nchw, c_nchw, w_packed, kernel_size):
    """ConvLSTMCell.forward with a prepacked weight.  NCHW in / NCHW out."""
    B, IN_DIM, H, W = x_nchw.shape
    HD = h_nchw.shape[1]
    KH, KW = kernel_size
    CIN = IN_DIM + HD
    COUT, K_pad = w_packed.shape
    K = KH * KW * CIN
    ph, pw = KH // 2, KW // 2
    M = H * W
    BM = B * M

    assert COUT == 4 * HD, "packed weight does not match hidden_dim"
    assert HD % 8 == 0, "hidden_dim must be a multiple of 8 (sublane-aligned gates)"
    assert K_pad >= K + 1, "packed weight too narrow for this input/kernel size"
    lane_chunk = 128 if BM % 128 == 0 else BM

    # --- layout glue in plain JAX, bf16 from the concat onward ---
    combined = jnp.concatenate([x_nchw, h_nchw], axis=1).astype(jnp.bfloat16)
    combined = jnp.transpose(combined, (1, 0, 2, 3))            # (CIN, B, H, W)
    combined_p = jnp.pad(combined, ((0, 0), (0, 0), (ph, ph), (pw, pw)))
    # Patches^T: (K, BM); K index order (kh, kw, cin) matches w_packed.
    slabs = [combined_p[:, :, kh:kh + H, kw:kw + W].reshape(CIN, BM)
             for kh in range(KH) for kw in range(KW)]
    patches = jnp.concatenate(
        slabs
        + [jnp.ones((1, BM), jnp.bfloat16)]                      # folded-bias row
        + [jnp.zeros((K_pad - K - 1, BM), jnp.bfloat16)],        # contraction pad
        axis=0)                                                   # (K_pad, BM)

    c_flat = jnp.transpose(c_nchw, (1, 0, 2, 3)).reshape(HD, BM).astype(jnp.float32)

    kernel = functools.partial(_convlstm_cell_kernel, HD=HD, lane_chunk=lane_chunk)

    h_flat, c_next_flat = pl.pallas_call(
        kernel,
        out_shape=(jax.ShapeDtypeStruct((HD, BM), x_nchw.dtype),
                   jax.ShapeDtypeStruct((HD, BM), c_nchw.dtype)),
        in_specs=[pl.BlockSpec(memory_space=pltpu.MemorySpace.VMEM)] * 3,
        out_specs=(pl.BlockSpec(memory_space=pltpu.MemorySpace.VMEM),
                   pl.BlockSpec(memory_space=pltpu.MemorySpace.VMEM)),
        scratch_shapes=[pltpu.VMEM((COUT, BM), jnp.float32)],
    )(patches, w_packed, c_flat)
    # TODO(synk): for large spatial sizes add an M-tile grid axis (lane tile a
    # multiple of 128) and set vmem_limit_bytes; whole-image VMEM blocks only
    # fit at small H*W (<1 MiB total here).

    h_next = jnp.transpose(h_flat.reshape(HD, B, H, W), (1, 0, 2, 3))
    c_next = jnp.transpose(c_next_flat.reshape(HD, B, H, W), (1, 0, 2, 3))
    return h_next, c_next


def convlstm_cell_forward(x_nchw, h_nchw, c_nchw, weight_oihw, bias):
    """ConvLSTMCell.forward; inputs NCHW, weight OIHW, bias (4*HD,) (PyTorch)."""
    KH, KW = weight_oihw.shape[2], weight_oihw.shape[3]
    w_packed = prepack_conv_weight(weight_oihw, bias)
    return convlstm_cell_forward_packed(x_nchw, h_nchw, c_nchw, w_packed, (KH, KW))


def _reference(x_nchw, h_nchw, c_nchw, weight_oihw, bias):
    """Pure-JAX reference mirroring the PyTorch forward (NCHW / OIHW)."""
    combined = jnp.concatenate([x_nchw, h_nchw], axis=1)
    out = jax.lax.conv_general_dilated(
        combined, weight_oihw, window_strides=(1, 1), padding="SAME",
        dimension_numbers=("NCHW", "OIHW", "NCHW"),
        precision=jax.lax.Precision.HIGHEST)
    out = out + bias[None, :, None, None]
    cc_i, cc_f, cc_o, cc_g = jnp.split(out, 4, axis=1)
    i = jax.nn.sigmoid(cc_i)
    f = jax.nn.sigmoid(cc_f)
    o = jax.nn.sigmoid(cc_o)
    g = jnp.tanh(cc_g)
    c_next = f * c_nchw + i * g
    h_next = o * jnp.tanh(c_next)
    return h_next, c_next


if __name__ == "__main__":
    # Small shapes consistent with the module: batch=2, input_dim=4,
    # hidden_dim=32, 16x16 spatial, kernel_size=(3, 3), bias=True.
    B, IN_DIM, HD, H, W = 2, 4, 32, 16, 16
    KH = KW = 3
    CIN, COUT = IN_DIM + HD, 4 * HD

    key = jax.random.PRNGKey(0)
    kx, kh0, kc0, kwgt, kb = jax.random.split(key, 5)

    x = jax.random.normal(kx, (B, IN_DIM, H, W), jnp.float32)
    h0 = jax.random.normal(kh0, (B, HD, H, W), jnp.float32)
    c0 = jax.random.normal(kc0, (B, HD, H, W), jnp.float32)

    # Deterministic parameter init mirroring nn.Conv2d + init.orthogonal_:
    # orthogonal weight (flattened over in*KH*KW), uniform(-1/sqrt(fan_in)) bias.
    w_flat = jax.nn.initializers.orthogonal()(kwgt, (COUT, CIN * KH * KW),
                                              jnp.float32)
    weight_oihw = w_flat.reshape(COUT, CIN, KH, KW)     # PyTorch (O, I, KH, KW)
    fan_in = CIN * KH * KW
    bound = 1.0 / (fan_in ** 0.5)
    bias = jax.random.uniform(kb, (COUT,), jnp.float32, -bound, bound)

    fwd = jax.jit(convlstm_cell_forward)
    h_next, c_next = fwd(x, h0, c0, weight_oihw, bias)
    jax.block_until_ready((h_next, c_next))

    h_ref, c_ref = _reference(x, h0, c0, weight_oihw, bias)
    assert h_next.shape == (B, HD, H, W) and c_next.shape == (B, HD, H, W)
    # Tolerance accommodates the single-pass bf16 MXU contraction (K=324, bias
    # folded into the contraction) vs the HIGHEST-precision f32 reference;
    # semantic bugs would give O(1) errors.
    assert jnp.allclose(h_next, h_ref, atol=1e-2, rtol=1e-2)
    assert jnp.allclose(c_next, c_ref, atol=1e-2, rtol=1e-2)

    print("KERNEL_OK")
</pallas_src>

<mosaic_0001>
module attributes {stable_mosaic.version = 11 : i64} {
  func.func @_convlstm_cell_kernel(%arg0: memref<384x512xbf16, #tpu.memory_space<vmem>>, %arg1: memref<128x384xbf16, #tpu.memory_space<vmem>>, %arg2: memref<32x512xf32, #tpu.memory_space<vmem>>, %arg3: memref<32x512xf32, #tpu.memory_space<vmem>>, %arg4: memref<32x512xf32, #tpu.memory_space<vmem>>, %arg5: memref<128x512xf32, #tpu.memory_space<vmem>>) attributes {dimension_semantics = [], scalar_prefetch = 0 : i64, scratch_operands = 1 : i64, tpu.core_type = #tpu.core_type<tc>} {
    %c0 = arith.constant 0 : index
    %c0_0 = arith.constant 0 : index
    %0 = vector.load %arg1[%c0, %c0_0] : memref<128x384xbf16, #tpu.memory_space<vmem>>, vector<128x384xbf16>
    %c0_1 = arith.constant 0 : index
    %c0_2 = arith.constant 0 : index
    %1 = vector.load %arg0[%c0_1, %c0_2] : memref<384x512xbf16, #tpu.memory_space<vmem>>, vector<384x512xbf16>
    %cst = arith.constant dense<0.000000e+00> : vector<128x512xf32>
    %2 = tpu.matmul %0, %1, %cst {dimension_numbers = #tpu.dot_dimension_numbers<[1], [0], [0], [1], [0, 0, 1, 1], [], []>} : vector<128x384xbf16>, vector<384x512xbf16>, vector<128x512xf32> -> vector<128x512xf32>
    %c0_3 = arith.constant 0 : index
    %c0_4 = arith.constant 0 : index
    %3 = vector.load %arg5[%c0_3, %c0_4] : memref<128x512xf32, #tpu.memory_space<vmem>>, vector<128x512xf32>
    tpu.vector_store %arg5[%c0_3, %c0_4], %2 {strides = array<i32>} : memref<128x512xf32, #tpu.memory_space<vmem>>, vector<128x512xf32>,
    %c0_i32 = arith.constant 0 : i32
    %c128_i32 = arith.constant 128 : i32
    %4 = arith.muli %c0_i32, %c128_i32 : i32
    %5 = tpu.assume_multiple %4, 128 : i32
    %c96 = arith.constant 96 : index
    %6 = arith.index_cast %5 : i32 to index
    %7 = vector.load %arg5[%c96, %6] : memref<128x512xf32, #tpu.memory_space<vmem>>, vector<32x128xf32>
    %8 = math.tanh %7 : vector<32x128xf32>
    %c0_5 = arith.constant 0 : index
    %9 = arith.index_cast %5 : i32 to index
    %10 = vector.load %arg5[%c0_5, %9] : memref<128x512xf32, #tpu.memory_space<vmem>>, vector<32x128xf32>
    %11 = arith.negf %10 : vector<32x128xf32>
    %12 = math.exp %11 : vector<32x128xf32>
    %cst_6 = arith.constant 1.000000e+00 : f32
    %13 = vector.broadcast %cst_6 : f32 to vector<32x128xf32>
    %14 = arith.addf %13, %12 : vector<32x128xf32>
    %15 = arith.divf %13, %14 : vector<32x128xf32>
    %16 = arith.mulf %15, %8 : vector<32x128xf32>
    %c32 = arith.constant 32 : index
    %17 = arith.index_cast %5 : i32 to index
    %18 = vector.load %arg5[%c32, %17] : memref<128x512xf32, #tpu.memory_space<vmem>>, vector<32x128xf32>
    %19 = arith.negf %18 : vector<32x128xf32>
    %20 = math.exp %19 : vector<32x128xf32>
    %cst_7 = arith.constant 1.000000e+00 : f32
    %21 = vector.broadcast %cst_7 : f32 to vector<32x128xf32>
    %22 = arith.addf %21, %20 : vector<32x128xf32>
    %23 = arith.divf %21, %22 : vector<32x128xf32>
    %c0_8 = arith.constant 0 : index
    %24 = arith.index_cast %5 : i32 to index
    %25 = vector.load %arg2[%c0_8, %24] : memref<32x512xf32, #tpu.memory_space<vmem>>, vector<32x128xf32>
    %26 = arith.mulf %23, %25 : vector<32x128xf32>
    %27 = arith.addf %26, %16 : vector<32x128xf32>
    %c0_9 = arith.constant 0 : index
    %28 = arith.index_cast %5 : i32 to index
    %29 = vector.load %arg4[%c0_9, %28] : memref<32x512xf32, #tpu.memory_space<vmem>>, vector<32x128xf32>
    tpu.vector_store %arg4[%c0_9, %28], %27 {strides = array<i32>} : memref<32x512xf32, #tpu.memory_space<vmem>>, vector<32x128xf32>,
    %c64 = arith.constant 64 : index
    %30 = arith.index_cast %5 : i32 to index
    %31 = vector.load %arg5[%c64, %30] : memref<128x512xf32, #tpu.memory_space<vmem>>, vector<32x128xf32>
    %32 = arith.negf %31 : vector<32x128xf32>
    %33 = math.exp %32 : vector<32x128xf32>
    %cst_10 = arith.constant 1.000000e+00 : f32
    %34 = vector.broadcast %cst_10 : f32 to vector<32x128xf32>
    %35 = arith.addf %34, %33 : vector<32x128xf32>
    %36 = arith.divf %34, %35 : vector<32x128xf32>
    %37 = math.tanh %27 : vector<32x128xf32>
    %38 = arith.mulf %36, %37 : vector<32x128xf32>
    %c0_11 = arith.constant 0 : index
    %39 = arith.index_cast %5 : i32 to index
    %40 = vector.load %arg3[%c0_11, %39] : memref<32x512xf32, #tpu.memory_space<vmem>>, vector<32x128xf32>
    tpu.vector_store %arg3[%c0_11, %39], %38 {strides = array<i32>} : memref<32x512xf32, #tpu.memory_space<vmem>>, vector<32x128xf32>,
    %c1_i32 = arith.constant 1 : i32
    %c128_i32_12 = arith.constant 128 : i32
    %41 = arith.muli %c1_i32, %c128_i32_12 : i32
    %42 = tpu.assume_multiple %41, 128 : i32
    %c96_13 = arith.constant 96 : index
    %43 = arith.index_cast %42 : i32 to index
    %44 = vector.load %arg5[%c96_13, %43] : memref<128x512xf32, #tpu.memory_space<vmem>>, vector<32x128xf32>
    %45 = math.tanh %44 : vector<32x128xf32>
    %c0_14 = arith.constant 0 : index
    %46 = arith.index_cast %42 : i32 to index
    %47 = vector.load %arg5[%c0_14, %46] : memref<128x512xf32, #tpu.memory_space<vmem>>, vector<32x128xf32>
    %48 = arith.negf %47 : vector<32x128xf32>
    %49 = math.exp %48 : vector<32x128xf32>
    %cst_15 = arith.constant 1.000000e+00 : f32
    %50 = vector.broadcast %cst_15 : f32 to vector<32x128xf32>
    %51 = arith.addf %50, %49 : vector<32x128xf32>
    %52 = arith.divf %50, %51 : vector<32x128xf32>
    %53 = arith.mulf %52, %45 : vector<32x128xf32>
    %c32_16 = arith.constant 32 : index
    %54 = arith.index_cast %42 : i32 to index
    %55 = vector.load %arg5[%c32_16, %54] : memref<128x512xf32, #tpu.memory_space<vmem>>, vector<32x128xf32>
    %56 = arith.negf %55 : vector<32x128xf32>
    %57 = math.exp %56 : vector<32x128xf32>
    %cst_17 = arith.constant 1.000000e+00 : f32
    %58 = vector.broadcast %cst_17 : f32 to vector<32x128xf32>
    %59 = arith.addf %58, %57 : vector<32x128xf32>
    %60 = arith.divf %58, %59 : vector<32x128xf32>
    %c0_18 = arith.constant 0 : index
    %61 = arith.index_cast %42 : i32 to index
    %62 = vector.load %arg2[%c0_18, %61] : memref<32x512xf32, #tpu.memory_space<vmem>>, vector<32x128xf32>
    %63 = arith.mulf %60, %62 : vector<32x128xf32>
    %64 = arith.addf %63, %53 : vector<32x128xf32>
    %c0_19 = arith.constant 0 : index
    %65 = arith.index_cast %42 : i32 to index
    %66 = vector.load %arg4[%c0_19, %65] : memref<32x512xf32, #tpu.memory_space<vmem>>, vector<32x128xf32>
    tpu.vector_store %arg4[%c0_19, %65], %64 {strides = array<i32>} : memref<32x512xf32, #tpu.memory_space<vmem>>, vector<32x128xf32>,
    %c64_20 = arith.constant 64 : index
    %67 = arith.index_cast %42 : i32 to index
    %68 = vector.load %arg5[%c64_20, %67] : memref<128x512xf32, #tpu.memory_space<vmem>>, vector<32x128xf32>
    %69 = arith.negf %68 : vector<32x128xf32>
    %70 = math.exp %69 : vector<32x128xf32>
    %cst_21 = arith.constant 1.000000e+00 : f32
    %71 = vector.broadcast %cst_21 : f32 to vector<32x128xf32>
    %72 = arith.addf %71, %70 : vector<32x128xf32>
    %73 = arith.divf %71, %72 : vector<32x128xf32>
    %74 = math.tanh %64 : vector<32x128xf32>
    %75 = arith.mulf %73, %74 : vector<32x128xf32>
    %c0_22 = arith.constant 0 : index
    %76 = arith.index_cast %42 : i32 to index
    %77 = vector.load %arg3[%c0_22, %76] : memref<32x512xf32, #tpu.memory_space<vmem>>, vector<32x128xf32>
    tpu.vector_store %arg3[%c0_22, %76], %75 {strides = array<i32>} : memref<32x512xf32, #tpu.memory_space<vmem>>, vector<32x128xf32>,
    %c2_i32 = arith.constant 2 : i32
    %c128_i32_23 = arith.constant 128 : i32
    %78 = arith.muli %c2_i32, %c128_i32_23 : i32
    %79 = tpu.assume_multiple %78, 128 : i32
    %c96_24 = arith.constant 96 : index
    %80 = arith.index_cast %79 : i32 to index
    %81 = vector.load %arg5[%c96_24, %80] : memref<128x512xf32, #tpu.memory_space<vmem>>, vector<32x128xf32>
    %82 = math.tanh %81 : vector<32x128xf32>
    %c0_25 = arith.constant 0 : index
    %83 = arith.index_cast %79 : i32 to index
    %84 = vector.load %arg5[%c0_25, %83] : memref<128x512xf32, #tpu.memory_space<vmem>>, vector<32x128xf32>
    %85 = arith.negf %84 : vector<32x128xf32>
    %86 = math.exp %85 : vector<32x128xf32>
    %cst_26 = arith.constant 1.000000e+00 : f32
    %87 = vector.broadcast %cst_26 : f32 to vector<32x128xf32>
    %88 = arith.addf %87, %86 : vector<32x128xf32>
    %89 = arith.divf %87, %88 : vector<32x128xf32>
    %90 = arith.mulf %89, %82 : vector<32x128xf32>
    %c32_27 = arith.constant 32 : index
    %91 = arith.index_cast %79 : i32 to index
    %92 = vector.load %arg5[%c32_27, %91] : memref<128x512xf32, #tpu.memory_space<vmem>>, vector<32x128xf32>
    %93 = arith.negf %92 : vector<32x128xf32>
    %94 = math.exp %93 : vector<32x128xf32>
    %cst_28 = arith.constant 1.000000e+00 : f32
    %95 = vector.broadcast %cst_28 : f32 to vector<32x128xf32>
    %96 = arith.addf %95, %94 : vector<32x128xf32>
    %97 = arith.divf %95, %96 : vector<32x128xf32>
    %c0_29 = arith.constant 0 : index
    %98 = arith.index_cast %79 : i32 to index
    %99 = vector.load %arg2[%c0_29, %98] : memref<32x512xf32, #tpu.memory_space<vmem>>, vector<32x128xf32>
    %100 = arith.mulf %97, %99 : vector<32x128xf32>
    %101 = arith.addf %100, %90 : vector<32x128xf32>
    %c0_30 = arith.constant 0 : index
    %102 = arith.index_cast %79 : i32 to index
    %103 = vector.load %arg4[%c0_30, %102] : memref<32x512xf32, #tpu.memory_space<vmem>>, vector<32x128xf32>
    tpu.vector_store %arg4[%c0_30, %102], %101 {strides = array<i32>} : memref<32x512xf32, #tpu.memory_space<vmem>>, vector<32x128xf32>,
    %c64_31 = arith.constant 64 : index
    %104 = arith.index_cast %79 : i32 to index
    %105 = vector.load %arg5[%c64_31, %104] : memref<128x512xf32, #tpu.memory_space<vmem>>, vector<32x128xf32>
    %106 = arith.negf %105 : vector<32x128xf32>
    %107 = math.exp %106 : vector<32x128xf32>
    %cst_32 = arith.constant 1.000000e+00 : f32
    %108 = vector.broadcast %cst_32 : f32 to vector<32x128xf32>
    %109 = arith.addf %108, %107 : vector<32x128xf32>
    %110 = arith.divf %108, %109 : vector<32x128xf32>
    %111 = math.tanh %101 : vector<32x128xf32>
    %112 = arith.mulf %110, %111 : vector<32x128xf32>
    %c0_33 = arith.constant 0 : index
    %113 = arith.index_cast %79 : i32 to index
    %114 = vector.load %arg3[%c0_33, %113] : memref<32x512xf32, #tpu.memory_space<vmem>>, vector<32x128xf32>
    tpu.vector_store %arg3[%c0_33, %113], %112 {strides = array<i32>} : memref<32x512xf32, #tpu.memory_space<vmem>>, vector<32x128xf32>,
    %c3_i32 = arith.constant 3 : i32
    %c128_i32_34 = arith.constant 128 : i32
    %115 = arith.muli %c3_i32, %c128_i32_34 : i32
    %116 = tpu.assume_multiple %115, 128 : i32
    %c96_35 = arith.constant 96 : index
    %117 = arith.index_cast %116 : i32 to index
    %118 = vector.load %arg5[%c96_35, %117] : memref<128x512xf32, #tpu.memory_space<vmem>>, vector<32x128xf32>
    %119 = math.tanh %118 : vector<32x128xf32>
    %c0_36 = arith.constant 0 : index
    %120 = arith.index_cast %116 : i32 to index
    %121 = vector.load %arg5[%c0_36, %120] : memref<128x512xf32, #tpu.memory_space<vmem>>, vector<32x128xf32>
    %122 = arith.negf %121 : vector<32x128xf32>
    %123 = math.exp %122 : vector<32x128xf32>
    %cst_37 = arith.constant 1.000000e+00 : f32
    %124 = vector.broadcast %cst_37 : f32 to vector<32x128xf32>
    %125 = arith.addf %124, %123 : vector<32x128xf32>
    %126 = arith.divf %124, %125 : vector<32x128xf32>
    %127 = arith.mulf %126, %119 : vector<32x128xf32>
    %c32_38 = arith.constant 32 : index
    %128 = arith.index_cast %116 : i32 to index
    %129 = vector.load %arg5[%c32_38, %128] : memref<128x512xf32, #tpu.memory_space<vmem>>, vector<32x128xf32>
    %130 = arith.negf %129 : vector<32x128xf32>
    %131 = math.exp %130 : vector<32x128xf32>
    %cst_39 = arith.constant 1.000000e+00 : f32
    %132 = vector.broadcast %cst_39 : f32 to vector<32x128xf32>
    %133 = arith.addf %132, %131 : vector<32x128xf32>
    %134 = arith.divf %132, %133 : vector<32x128xf32>
    %c0_40 = arith.constant 0 : index
    %135 = arith.index_cast %116 : i32 to index
    %136 = vector.load %arg2[%c0_40, %135] : memref<32x512xf32, #tpu.memory_space<vmem>>, vector<32x128xf32>
    %137 = arith.mulf %134, %136 : vector<32x128xf32>
    %138 = arith.addf %137, %127 : vector<32x128xf32>
    %c0_41 = arith.constant 0 : index
    %139 = arith.index_cast %116 : i32 to index
    %140 = vector.load %arg4[%c0_41, %139] : memref<32x512xf32, #tpu.memory_space<vmem>>, vector<32x128xf32>
    tpu.vector_store %arg4[%c0_41, %139], %138 {strides = array<i32>} : memref<32x512xf32, #tpu.memory_space<vmem>>, vector<32x128xf32>,
    %c64_42 = arith.constant 64 : index
    %141 = arith.index_cast %116 : i32 to index
    %142 = vector.load %arg5[%c64_42, %141] : memref<128x512xf32, #tpu.memory_space<vmem>>, vector<32x128xf32>
    %143 = arith.negf %142 : vector<32x128xf32>
    %144 = math.exp %143 : vector<32x128xf32>
    %cst_43 = arith.constant 1.000000e+00 : f32
    %145 = vector.broadcast %cst_43 : f32 to vector<32x128xf32>
    %146 = arith.addf %145, %144 : vector<32x128xf32>
    %147 = arith.divf %145, %146 : vector<32x128xf32>
    %148 = math.tanh %138 : vector<32x128xf32>
    %149 = arith.mulf %147, %148 : vector<32x128xf32>
    %c0_44 = arith.constant 0 : index
    %150 = arith.index_cast %116 : i32 to index
    %151 = vector.load %arg3[%c0_44, %150] : memref<32x512xf32, #tpu.memory_space<vmem>>, vector<32x128xf32>
    tpu.vector_store %arg3[%c0_44, %150], %149 {strides = array<i32>} : memref<32x512xf32, #tpu.memory_space<vmem>>, vector<32x128xf32>,
    %c4_i32 = arith.constant 4 : i32
    return
  }
}

</mosaic_0001>

<llo_original>
// kernel: convlstm_cell_forward.1
$region0: #{convlstm_cell_forward.1}
  #allocation0 [shape = 'u32[]', space=smem, size = 0x4, offset = 0x4, fixed_abs, tag = 'smem constant byte address 0x4 - core index']
  #allocation1 [shape = 'u32[72,128]{1,0:T(1,128)}', space=vmem, size = 0x9000, scoped, tag = 'internal scratch']
  #allocation2 [shape = 'f32[128,512]{1,0:T(8,128)}', space=vmem, size = 0x40000, scoped, tag = 'scratch operand']
  %s0 = inlined_call_operand.vmem [shape: bf16[384,512], index: 0, kind: input, shape index: {}]
  %s1 = inlined_call_operand.vmem [shape: bf16[128,384], index: 1, kind: input, shape index: {}]
  %s2 = inlined_call_operand.vmem [shape: f32[32,512], index: 2, kind: input, shape index: {}]
  %s3 = inlined_call_operand.vmem [shape: f32[32,512], index: 3, kind: output, shape index: {0}]
  %s4 = inlined_call_operand.vmem [shape: f32[32,512], index: 4, kind: output, shape index: {1}]
  %5 = xla_tuple %s3, %s4
  %s6 = sld [smem:[#allocation0]]
  $region30: #{convlstm_cell_forward.1} parent=0
    _
  %s8 = ssub.s32 1, %s6
  %s9 = scalar_select 0, %s8, %s6
  // Predicated region
  $region2: #{convlstm_cell_forward.1} parent=0 // pred_check
    _
  $region3: #{convlstm_cell_forward.1} parent=0 // pred_check_branch
    %11 = sbr.rel (0) target = $region5
  $region4: #{convlstm_cell_forward.1} parent=0 // pred_region
    _
  $region5: #{convlstm_cell_forward.1} parent=0 // pred_fallthru
    _
  // Predicated region
  $region6: #{convlstm_cell_forward.1} parent=0 // pred_check
    _
  $region7: #{convlstm_cell_forward.1} parent=0 // pred_check_branch
    %13 = sbr.rel (0) target = $region9
  $region8: #{convlstm_cell_forward.1} parent=0 // pred_region
    _
  $region9: #{convlstm_cell_forward.1} parent=0 // pred_fallthru
    _
  // Predicated region
  $region10: #{convlstm_cell_forward.1} parent=0 // pred_check
    _
  $region11: #{convlstm_cell_forward.1} parent=0 // pred_check_branch
    %15 = sbr.rel (0) target = $region13
  $region12: #{convlstm_cell_forward.1} parent=0 // pred_region
    _
  $region13: #{convlstm_cell_forward.1} parent=0 // pred_fallthru
    _
  %v16 = vld [vmem:[%s1] sm:$0xff]
  %v17 = vld [vmem:[%s1 + $0x8] sm:$0xf]
  %v18 = vld [vmem:[%s1 + $0xc] sm:$0xff]
  %v19 = vld [vmem:[%s1 + $0x14] sm:$0xf]
  %v20 = vld [vmem:[%s1 + $0x18] sm:$0xff]
  %v21 = vld [vmem:[%s1 + $0x20] sm:$0xf]
  %v22 = vld [vmem:[%s1 + $0x24] sm:$0xff]
  %v23 = vld [vmem:[%s1 + $0x2c] sm:$0xf]
  %v24 = vld [vmem:[%s1 + $0x30] sm:$0xff]
  %v25 = vld [vmem:[%s1 + $0x38] sm:$0xf]
  %v26 = vld [vmem:[%s1 + $0x3c] sm:$0xff]
  %v27 = vld [vmem:[%s1 + $0x44] sm:$0xf]
  %v28 = vld [vmem:[%s1 + $0x48] sm:$0xff]
  %v29 = vld [vmem:[%s1 + $0x50] sm:$0xf]
  %v30 = vld [vmem:[%s1 + $0x54] sm:$0xff]
  %v31 = vld [vmem:[%s1 + $0x5c] sm:$0xf]
  %v32 = vld [vmem:[%s1 + $0x60] sm:$0xff]
  %v33 = vld [vmem:[%s1 + $0x68] sm:$0xf]
  %v34 = vld [vmem:[%s1 + $0x6c] sm:$0xff]
  %v35 = vld [vmem:[%s1 + $0x74] sm:$0xf]
  %v36 = vld [vmem:[%s1 + $0x78] sm:$0xff]
  %v37 = vld [vmem:[%s1 + $0x80] sm:$0xf]
  %v38 = vld [vmem:[%s1 + $0x84] sm:$0xff]
  %v39 = vld [vmem:[%s1 + $0x8c] sm:$0xf]
  %v40 = vld [vmem:[%s1 + $0x90] sm:$0xff]
  %v41 = vld [vmem:[%s1 + $0x98] sm:$0xf]
  %v42 = vld [vmem:[%s1 + $0x9c] sm:$0xff]
  %v43 = vld [vmem:[%s1 + $0xa4] sm:$0xf]
  %v44 = vld [vmem:[%s1 + $0xa8] sm:$0xff]
  %v45 = vld [vmem:[%s1 + $0xb0] sm:$0xf]
  %v46 = vld [vmem:[%s1 + $0xb4] sm:$0xff]
  %v47 = vld [vmem:[%s1 + $0xbc] sm:$0xf]
  %v48 = vld [vmem:[%s0] sm:$0xff]
  %v49 = vld [vmem:[%s0 + $0x8] sm:$0xff]
  %v50 = vld [vmem:[%s0 + $0x10] sm:$0xff]
  %v51 = vld [vmem:[%s0 + $0x18] sm:$0xff]
  %v52 = vld [vmem:[%s0 + $0x20] sm:$0xff]
  %v53 = vld [vmem:[%s0 + $0x28] sm:$0xff]
  %v54 = vld [vmem:[%s0 + $0x30] sm:$0xff]
  %v55 = vld [vmem:[%s0 + $0x38] sm:$0xff]
  %v56 = vld [vmem:[%s0 + $0x40] sm:$0xff]
  %v57 = vld [vmem:[%s0 + $0x48] sm:$0xff]
  %v58 = vld [vmem:[%s0 + $0x50] sm:$0xff]
  %v59 = vld [vmem:[%s0 + $0x58] sm:$0xff]
  %v60 = vld [vmem:[%s0 + $0x60] sm:$0xff]
  %v61 = vld [vmem:[%s0 + $0x68] sm:$0xff]
  %v62 = vld [vmem:[%s0 + $0x70] sm:$0xff]
  %v63 = vld [vmem:[%s0 + $0x78] sm:$0xff]
  %v64 = vld [vmem:[%s0 + $0x80] sm:$0xff]
  %v65 = vld [vmem:[%s0 + $0x88] sm:$0xff]
  %v66 = vld [vmem:[%s0 + $0x90] sm:$0xff]
  %v67 = vld [vmem:[%s0 + $0x98] sm:$0xff]
  %v68 = vld [vmem:[%s0 + $0xa0] sm:$0xff]
  %v69 = vld [vmem:[%s0 + $0xa8] sm:$0xff]
  %v70 = vld [vmem:[%s0 + $0xb0] sm:$0xff]
  %v71 = vld [vmem:[%s0 + $0xb8] sm:$0xff]
  %v72 = vld [vmem:[%s0 + $0xc0] sm:$0xff]
  %v73 = vld [vmem:[%s0 + $0xc8] sm:$0xff]
  %v74 = vld [vmem:[%s0 + $0xd0] sm:$0xff]
  %v75 = vld [vmem:[%s0 + $0xd8] sm:$0xff]
  %v76 = vld [vmem:[%s0 + $0xe0] sm:$0xff]
  %v77 = vld [vmem:[%s0 + $0xe8] sm:$0xff]
  %v78 = vld [vmem:[%s0 + $0xf0] sm:$0xff]
  %v79 = vld [vmem:[%s0 + $0xf8] sm:$0xff]
  %v80 = vld [vmem:[%s0 + $0x100] sm:$0xff]
  %v81 = vld [vmem:[%s0 + $0x108] sm:$0xff]
  %v82 = vld [vmem:[%s0 + $0x110] sm:$0xff]
  %v83 = vld [vmem:[%s0 + $0x118] sm:$0xff]
  %v84 = vld [vmem:[%s0 + $0x120] sm:$0xff]
  %v85 = vld [vmem:[%s0 + $0x128] sm:$0xff]
  %v86 = vld [vmem:[%s0 + $0x130] sm:$0xff]
  %v87 = vld [vmem:[%s0 + $0x138] sm:$0xff]
  %v88 = vld [vmem:[%s0 + $0x140] sm:$0xff]
  %v89 = vld [vmem:[%s0 + $0x148] sm:$0xff]
  %v90 = vld [vmem:[%s0 + $0x150] sm:$0xff]
  %v91 = vld [vmem:[%s0 + $0x158] sm:$0xff]
  %v92 = vld [vmem:[%s0 + $0x160] sm:$0xff]
  %v93 = vld [vmem:[%s0 + $0x168] sm:$0xff]
  %v94 = vld [vmem:[%s0 + $0x170] sm:$0xff]
  %v95 = vld [vmem:[%s0 + $0x178] sm:$0xff]
  %v96 = vld [vmem:[%s0 + $0x180] sm:$0xff]
  %v97 = vld [vmem:[%s0 + $0x188] sm:$0xff]
  %v98 = vld [vmem:[%s0 + $0x190] sm:$0xff]
  %v99 = vld [vmem:[%s0 + $0x198] sm:$0xff]
  %v100 = vld [vmem:[%s0 + $0x1a0] sm:$0xff]
  %v101 = vld [vmem:[%s0 + $0x1a8] sm:$0xff]
  %v102 = vld [vmem:[%s0 + $0x1b0] sm:$0xff]
  %v103 = vld [vmem:[%s0 + $0x1b8] sm:$0xff]
  %v104 = vld [vmem:[%s0 + $0x1c0] sm:$0xff]
  %v105 = vld [vmem:[%s0 + $0x1c8] sm:$0xff]
  %v106 = vld [vmem:[%s0 + $0x1d0] sm:$0xff]
  %v107 = vld [vmem:[%s0 + $0x1d8] sm:$0xff]
  %v108 = vld [vmem:[%s0 + $0x1e0] sm:$0xff]
  %v109 = vld [vmem:[%s0 + $0x1e8] sm:$0xff]
  %v110 = vld [vmem:[%s0 + $0x1f0] sm:$0xff]
  %v111 = vld [vmem:[%s0 + $0x1f8] sm:$0xff]
  %v112 = vld [vmem:[%s0 + $0x200] sm:$0xff]
  %v113 = vld [vmem:[%s0 + $0x208] sm:$0xff]
  %v114 = vld [vmem:[%s0 + $0x210] sm:$0xff]
  %v115 = vld [vmem:[%s0 + $0x218] sm:$0xff]
  %v116 = vld [vmem:[%s0 + $0x220] sm:$0xff]
  %v117 = vld [vmem:[%s0 + $0x228] sm:$0xff]
  %v118 = vld [vmem:[%s0 + $0x230] sm:$0xff]
  %v119 = vld [vmem:[%s0 + $0x238] sm:$0xff]
  %v120 = vld [vmem:[%s0 + $0x240] sm:$0xff]
  %v121 = vld [vmem:[%s0 + $0x248] sm:$0xff]
  %v122 = vld [vmem:[%s0 + $0x250] sm:$0xff]
  %v123 = vld [vmem:[%s0 + $0x258] sm:$0xff]
  %v124 = vld [vmem:[%s0 + $0x260] sm:$0xff]
  %v125 = vld [vmem:[%s0 + $0x268] sm:$0xff]
  %v126 = vld [vmem:[%s0 + $0x270] sm:$0xff]
  %v127 = vld [vmem:[%s0 + $0x278] sm:$0xff]
  %v128 = vld [vmem:[%s0 + $0x280] sm:$0xff]
  %v129 = vld [vmem:[%s0 + $0x288] sm:$0xff]
  %v130 = vld [vmem:[%s0 + $0x290] sm:$0xff]
  %v131 = vld [vmem:[%s0 + $0x298] sm:$0xff]
  %v132 = vld [vmem:[%s0 + $0x2a0] sm:$0xff]
  %v133 = vld [vmem:[%s0 + $0x2a8] sm:$0xff]
  %v134 = vld [vmem:[%s0 + $0x2b0] sm:$0xff]
  %v135 = vld [vmem:[%s0 + $0x2b8] sm:$0xff]
  %v136 = vld [vmem:[%s0 + $0x2c0] sm:$0xff]
  %v137 = vld [vmem:[%s0 + $0x2c8] sm:$0xff]
  %v138 = vld [vmem:[%s0 + $0x2d0] sm:$0xff]
  %v139 = vld [vmem:[%s0 + $0x2d8] sm:$0xff]
  %v140 = vld [vmem:[%s0 + $0x2e0] sm:$0xff]
  %v141 = vld [vmem:[%s0 + $0x2e8] sm:$0xff]
  %v142 = vld [vmem:[%s0 + $0x2f0] sm:$0xff]
  %v143 = vld [vmem:[%s0 + $0x2f8] sm:$0xff]
  %v176 = vunpack.c.l.b16 %v16
  %v177 = vunpack.c.h.b16 %v16
  %v178 = vunpack.c.l.b16 %v17
  %v179 = vunpack.c.l.b16 %v18
  %v180 = vunpack.c.h.b16 %v18
  %v181 = vunpack.c.l.b16 %v19
  %v182 = vunpack.c.l.b16 %v20
  %v183 = vunpack.c.h.b16 %v20
  %v184 = vunpack.c.l.b16 %v21
  %v185 = vunpack.c.l.b16 %v22
  %v186 = vunpack.c.h.b16 %v22
  %v187 = vunpack.c.l.b16 %v23
  %v188 = vunpack.c.l.b16 %v24
  %v189 = vunpack.c.h.b16 %v24
  %v190 = vunpack.c.l.b16 %v25
  %v191 = vunpack.c.l.b16 %v26
  %v192 = vunpack.c.h.b16 %v26
  %v193 = vunpack.c.l.b16 %v27
  %v194 = vunpack.c.l.b16 %v28
  %v195 = vunpack.c.h.b16 %v28
  %v196 = vunpack.c.l.b16 %v29
  %v197 = vunpack.c.l.b16 %v30
  %v198 = vunpack.c.h.b16 %v30
  %v199 = vunpack.c.l.b16 %v31
  %v200 = vunpack.c.l.b16 %v32
  %v201 = vunpack.c.h.b16 %v32
  %v202 = vunpack.c.l.b16 %v33
  %v203 = vunpack.c.l.b16 %v34
  %v204 = vunpack.c.h.b16 %v34
  %v205 = vunpack.c.l.b16 %v35
  %v206 = vunpack.c.l.b16 %v36
  %v207 = vunpack.c.h.b16 %v36
  %v208 = vunpack.c.l.b16 %v37
  %v209 = vunpack.c.l.b16 %v38
  %v210 = vunpack.c.h.b16 %v38
  %v211 = vunpack.c.l.b16 %v39
  %v212 = vunpack.c.l.b16 %v40
  %v213 = vunpack.c.h.b16 %v40
  %v214 = vunpack.c.l.b16 %v41
  %v215 = vunpack.c.l.b16 %v42
  %v216 = vunpack.c.h.b16 %v42
  %v217 = vunpack.c.l.b16 %v43
  %v218 = vunpack.c.l.b16 %v44
  %v219 = vunpack.c.h.b16 %v44
  %v220 = vunpack.c.l.b16 %v45
  %v221 = vunpack.c.l.b16 %v46
  %v222 = vunpack.c.h.b16 %v46
  %v223 = vunpack.c.l.b16 %v47
  %v224 = vpack.c.b16 %v179, %v176
  %v225 = vpack.c.b16 %v180, %v177
  %v226 = vpack.c.b16 %v181, %v178
  %v227 = vpack.c.b16 %v185, %v182
  %v228 = vpack.c.b16 %v186, %v183
  %v229 = vpack.c.b16 %v187, %v184
  %v230 = vpack.c.b16 %v191, %v188
  %v231 = vpack.c.b16 %v192, %v189
  %v232 = vpack.c.b16 %v193, %v190
  %v233 = vpack.c.b16 %v197, %v194
  %v234 = vpack.c.b16 %v198, %v195
  %v235 = vpack.c.b16 %v199, %v196
  %v236 = vpack.c.b16 %v203, %v200
  %v237 = vpack.c.b16 %v204, %v201
  %v238 = vpack.c.b16 %v205, %v202
  %v239 = vpack.c.b16 %v209, %v206
  %v240 = vpack.c.b16 %v210, %v207
  %v241 = vpack.c.b16 %v211, %v208
  %v242 = vpack.c.b16 %v215, %v212
  %v243 = vpack.c.b16 %v216, %v213
  %v244 = vpack.c.b16 %v217, %v214
  %v245 = vpack.c.b16 %v221, %v218
  %v246 = vpack.c.b16 %v222, %v219
  %v247 = vpack.c.b16 %v223, %v220
  %v368 = vunpack.c.l.b16 %v48
  %v369 = vunpack.c.h.b16 %v48
  %v370 = vunpack.c.l.b16 %v49
  %v371 = vunpack.c.h.b16 %v49
  %v372 = vunpack.c.l.b16 %v50
  %v373 = vunpack.c.h.b16 %v50
  %v374 = vunpack.c.l.b16 %v51
  %v375 = vunpack.c.h.b16 %v51
  %v376 = vunpack.c.l.b16 %v52
  %v377 = vunpack.c.h.b16 %v52
  %v378 = vunpack.c.l.b16 %v53
  %v379 = vunpack.c.h.b16 %v53
  %v380 = vunpack.c.l.b16 %v54
  %v381 = vunpack.c.h.b16 %v54
  %v382 = vunpack.c.l.b16 %v55
  %v383 = vunpack.c.h.b16 %v55
  %v384 = vunpack.c.l.b16 %v56
  %v385 = vunpack.c.h.b16 %v56
  %v386 = vunpack.c.l.b16 %v57
  %v387 = vunpack.c.h.b16 %v57
  %v388 = vunpack.c.l.b16 %v58
  %v389 = vunpack.c.h.b16 %v58
  %v390 = vunpack.c.l.b16 %v59
  %v391 = vunpack.c.h.b16 %v59
  %v392 = vunpack.c.l.b16 %v60
  %v393 = vunpack.c.h.b16 %v60
  %v394 = vunpack.c.l.b16 %v61
  %v395 = vunpack.c.h.b16 %v61
  %v396 = vunpack.c.l.b16 %v62
  %v397 = vunpack.c.h.b16 %v62
  %v398 = vunpack.c.l.b16 %v63
  %v399 = vunpack.c.h.b16 %v63
  %v400 = vunpack.c.l.b16 %v64
  %v401 = vunpack.c.h.b16 %v64
  %v402 = vunpack.c.l.b16 %v65
  %v403 = vunpack.c.h.b16 %v65
  %v404 = vunpack.c.l.b16 %v66
  %v405 = vunpack.c.h.b16 %v66
  %v406 = vunpack.c.l.b16 %v67
  %v407 = vunpack.c.h.b16 %v67
  %v408 = vunpack.c.l.b16 %v68
  %v409 = vunpack.c.h.b16 %v68
  %v410 = vunpack.c.l.b16 %v69
  %v411 = vunpack.c.h.b16 %v69
  %v412 = vunpack.c.l.b16 %v70
  %v413 = vunpack.c.h.b16 %v70
  %v414 = vunpack.c.l.b16 %v71
  %v415 = vunpack.c.h.b16 %v71
  %v416 = vunpack.c.l.b16 %v72
  %v417 = vunpack.c.h.b16 %v72
  %v418 = vunpack.c.l.b16 %v73
  %v419 = vunpack.c.h.b16 %v73
  %v420 = vunpack.c.l.b16 %v74
  %v421 = vunpack.c.h.b16 %v74
  %v422 = vunpack.c.l.b16 %v75
  %v423 = vunpack.c.h.b16 %v75
  %v424 = vunpack.c.l.b16 %v76
  %v425 = vunpack.c.h.b16 %v76
  %v426 = vunpack.c.l.b16 %v77
  %v427 = vunpack.c.h.b16 %v77
  %v428 = vunpack.c.l.b16 %v78
  %v429 = vunpack.c.h.b16 %v78
  %v430 = vunpack.c.l.b16 %v79
  %v431 = vunpack.c.h.b16 %v79
  %v432 = vunpack.c.l.b16 %v80
  %v433 = vunpack.c.h.b16 %v80
  %v434 = vunpack.c.l.b16 %v81
  %v435 = vunpack.c.h.b16 %v81
  %v436 = vunpack.c.l.b16 %v82
  %v437 = vunpack.c.h.b16 %v82
  %v438 = vunpack.c.l.b16 %v83
  %v439 = vunpack.c.h.b16 %v83
  %v440 = vunpack.c.l.b16 %v84
  %v441 = vunpack.c.h.b16 %v84
  %v442 = vunpack.c.l.b16 %v85
  %v443 = vunpack.c.h.b16 %v85
  %v444 = vunpack.c.l.b16 %v86
  %v445 = vunpack.c.h.b16 %v86
  %v446 = vunpack.c.l.b16 %v87
  %v447 = vunpack.c.h.b16 %v87
  %v448 = vunpack.c.l.b16 %v88
  %v449 = vunpack.c.h.b16 %v88
  %v450 = vunpack.c.l.b16 %v89
  %v451 = vunpack.c.h.b16 %v89
  %v452 = vunpack.c.l.b16 %v90
  %v453 = vunpack.c.h.b16 %v90
  %v454 = vunpack.c.l.b16 %v91
  %v455 = vunpack.c.h.b16 %v91
  %v456 = vunpack.c.l.b16 %v92
  %v457 = vunpack.c.h.b16 %v92
  %v458 = vunpack.c.l.b16 %v93
  %v459 = vunpack.c.h.b16 %v93
  %v460 = vunpack.c.l.b16 %v94
  %v461 = vunpack.c.h.b16 %v94
  %v462 = vunpack.c.l.b16 %v95
  %v463 = vunpack.c.h.b16 %v95
  %v464 = vunpack.c.l.b16 %v96
  %v465 = vunpack.c.h.b16 %v96
  %v466 = vunpack.c.l.b16 %v97
  %v467 = vunpack.c.h.b16 %v97
  %v468 = vunpack.c.l.b16 %v98
  %v469 = vunpack.c.h.b16 %v98
  %v470 = vunpack.c.l.b16 %v99
  %v471 = vunpack.c.h.b16 %v99
  %v472 = vunpack.c.l.b16 %v100
  %v473 = vunpack.c.h.b16 %v100
  %v474 = vunpack.c.l.b16 %v101
  %v475 = vunpack.c.h.b16 %v101
  %v476 = vunpack.c.l.b16 %v102
  %v477 = vunpack.c.h.b16 %v102
  %v478 = vunpack.c.l.b16 %v103
  %v479 = vunpack.c.h.b16 %v103
  %v480 = vunpack.c.l.b16 %v104
  %v481 = vunpack.c.h.b16 %v104
  %v482 = vunpack.c.l.b16 %v105
  %v483 = vunpack.c.h.b16 %v105
  %v484 = vunpack.c.l.b16 %v106
  %v485 = vunpack.c.h.b16 %v106
  %v486 = vunpack.c.l.b16 %v107
  %v487 = vunpack.c.h.b16 %v107
  %v488 = vunpack.c.l.b16 %v108
  %v489 = vunpack.c.h.b16 %v108
  %v490 = vunpack.c.l.b16 %v109
  %v491 = vunpack.c.h.b16 %v109
  %v492 = vunpack.c.l.b16 %v110
  %v493 = vunpack.c.h.b16 %v110
  %v494 = vunpack.c.l.b16 %v111
  %v495 = vunpack.c.h.b16 %v111
  %v496 = vunpack.c.l.b16 %v112
  %v497 = vunpack.c.h.b16 %v112
  %v498 = vunpack.c.l.b16 %v113
  %v499 = vunpack.c.h.b16 %v113
  %v500 = vunpack.c.l.b16 %v114
  %v501 = vunpack.c.h.b16 %v114
  %v502 = vunpack.c.l.b16 %v115
  %v503 = vunpack.c.h.b16 %v115
  %v504 = vunpack.c.l.b16 %v116
  %v505 = vunpack.c.h.b16 %v116
  %v506 = vunpack.c.l.b16 %v117
  %v507 = vunpack.c.h.b16 %v117
  %v508 = vunpack.c.l.b16 %v118
  %v509 = vunpack.c.h.b16 %v118
  %v510 = vunpack.c.l.b16 %v119
  %v511 = vunpack.c.h.b16 %v119
  %v512 = vunpack.c.l.b16 %v120
  %v513 = vunpack.c.h.b16 %v120
  %v514 = vunpack.c.l.b16 %v121
  %v515 = vunpack.c.h.b16 %v121
  %v516 = vunpack.c.l.b16 %v122
  %v517 = vunpack.c.h.b16 %v122
  %v518 = vunpack.c.l.b16 %v123
  %v519 = vunpack.c.h.b16 %v123
  %v520 = vunpack.c.l.b16 %v124
  %v521 = vunpack.c.h.b16 %v124
  %v522 = vunpack.c.l.b16 %v125
  %v523 = vunpack.c.h.b16 %v125
  %v524 = vunpack.c.l.b16 %v126
  %v525 = vunpack.c.h.b16 %v126
  %v526 = vunpack.c.l.b16 %v127
  %v527 = vunpack.c.h.b16 %v127
  %v528 = vunpack.c.l.b16 %v128
  %v529 = vunpack.c.h.b16 %v128
  %v530 = vunpack.c.l.b16 %v129
  %v531 = vunpack.c.h.b16 %v129
  %v532 = vunpack.c.l.b16 %v130
  %v533 = vunpack.c.h.b16 %v130
  %v534 = vunpack.c.l.b16 %v131
  %v535 = vunpack.c.h.b16 %v131
  %v536 = vunpack.c.l.b16 %v132
  %v537 = vunpack.c.h.b16 %v132
  %v538 = vunpack.c.l.b16 %v133
  %v539 = vunpack.c.h.b16 %v133
  %v540 = vunpack.c.l.b16 %v134
  %v541 = vunpack.c.h.b16 %v134
  %v542 = vunpack.c.l.b16 %v135
  %v543 = vunpack.c.h.b16 %v135
  %v544 = vunpack.c.l.b16 %v136
  %v545 = vunpack.c.h.b16 %v136
  %v546 = vunpack.c.l.b16 %v137
  %v547 = vunpack.c.h.b16 %v137
  %v548 = vunpack.c.l.b16 %v138
  %v549 = vunpack.c.h.b16 %v138
  %v550 = vunpack.c.l.b16 %v139
  %v551 = vunpack.c.h.b16 %v139
  %v552 = vunpack.c.l.b16 %v140
  %v553 = vunpack.c.h.b16 %v140
  %v554 = vunpack.c.l.b16 %v141
  %v555 = vunpack.c.h.b16 %v141
  %v556 = vunpack.c.l.b16 %v142
  %v557 = vunpack.c.h.b16 %v142
  %v558 = vunpack.c.l.b16 %v143
  %v559 = vunpack.c.h.b16 %v143
  %v560 = vpack.c.b16 %v372, %v368
  %v561 = vpack.c.b16 %v373, %v369
  %v562 = vpack.c.b16 %v374, %v370
  %v563 = vpack.c.b16 %v375, %v371
  %v564 = vpack.c.b16 %v380, %v376
  %v565 = vpack.c.b16 %v381, %v377
  %v566 = vpack.c.b16 %v382, %v378
  %v567 = vpack.c.b16 %v383, %v379
  %v568 = vpack.c.b16 %v388, %v384
  %v569 = vpack.c.b16 %v389, %v385
  %v570 = vpack.c.b16 %v390, %v386
  %v571 = vpack.c.b16 %v391, %v387
  %v572 = vpack.c.b16 %v396, %v392
  %v573 = vpack.c.b16 %v397, %v393
  %v574 = vpack.c.b16 %v398, %v394
  %v575 = vpack.c.b16 %v399, %v395
  %v576 = vpack.c.b16 %v404, %v400
  %v577 = vpack.c.b16 %v405, %v401
  %v578 = vpack.c.b16 %v406, %v402
  %v579 = vpack.c.b16 %v407, %v403
  %v580 = vpack.c.b16 %v412, %v408
  %v581 = vpack.c.b16 %v413, %v409
  %v582 = vpack.c.b16 %v414, %v410
  %v583 = vpack.c.b16 %v415, %v411
  %v584 = vpack.c.b16 %v420, %v416
  %v585 = vpack.c.b16 %v421, %v417
  %v586 = vpack.c.b16 %v422, %v418
  %v587 = vpack.c.b16 %v423, %v419
  %v588 = vpack.c.b16 %v428, %v424
  %v589 = vpack.c.b16 %v429, %v425
  %v590 = vpack.c.b16 %v430, %v426
  %v591 = vpack.c.b16 %v431, %v427
  %v592 = vpack.c.b16 %v436, %v432
  %v593 = vpack.c.b16 %v437, %v433
  %v594 = vpack.c.b16 %v438, %v434
  %v595 = vpack.c.b16 %v439, %v435
  %v596 = vpack.c.b16 %v444, %v440
  %v597 = vpack.c.b16 %v445, %v441
  %v598 = vpack.c.b16 %v446, %v442
  %v599 = vpack.c.b16 %v447, %v443
  %v600 = vpack.c.b16 %v452, %v448
  %v601 = vpack.c.b16 %v453, %v449
  %v602 = vpack.c.b16 %v454, %v450
  %v603 = vpack.c.b16 %v455, %v451
  %v604 = vpack.c.b16 %v460, %v456
  %v605 = vpack.c.b16 %v461, %v457
  %v606 = vpack.c.b16 %v462, %v458
  %v607 = vpack.c.b16 %v463, %v459
  %v608 = vpack.c.b16 %v468, %v464
  %v609 = vpack.c.b16 %v469, %v465
  %v610 = vpack.c.b16 %v470, %v466
  %v611 = vpack.c.b16 %v471, %v467
  %v612 = vpack.c.b16 %v476, %v472
  %v613 = vpack.c.b16 %v477, %v473
  %v614 = vpack.c.b16 %v478, %v474
  %v615 = vpack.c.b16 %v479, %v475
  %v616 = vpack.c.b16 %v484, %v480
  %v617 = vpack.c.b16 %v485, %v481
  %v618 = vpack.c.b16 %v486, %v482
  %v619 = vpack.c.b16 %v487, %v483
  %v620 = vpack.c.b16 %v492, %v488
  %v621 = vpack.c.b16 %v493, %v489
  %v622 = vpack.c.b16 %v494, %v490
  %v623 = vpack.c.b16 %v495, %v491
  %v624 = vpack.c.b16 %v500, %v496
  %v625 = vpack.c.b16 %v501, %v497
  %v626 = vpack.c.b16 %v502, %v498
  %v627 = vpack.c.b16 %v503, %v499
  %v628 = vpack.c.b16 %v508, %v504
  %v629 = vpack.c.b16 %v509, %v505
  %v630 = vpack.c.b16 %v510, %v506
  %v631 = vpack.c.b16 %v511, %v507
  %v632 = vpack.c.b16 %v516, %v512
  %v633 = vpack.c.b16 %v517, %v513
  %v634 = vpack.c.b16 %v518, %v514
  %v635 = vpack.c.b16 %v519, %v515
  %v636 = vpack.c.b16 %v524, %v520
  %v637 = vpack.c.b16 %v525, %v521
  %v638 = vpack.c.b16 %v526, %v522
  %v639 = vpack.c.b16 %v527, %v523
  %v640 = vpack.c.b16 %v532, %v528
  %v641 = vpack.c.b16 %v533, %v529
  %v642 = vpack.c.b16 %v534, %v530
  %v643 = vpack.c.b16 %v535, %v531
  %v644 = vpack.c.b16 %v540, %v536
  %v645 = vpack.c.b16 %v541, %v537
  %v646 = vpack.c.b16 %v542, %v538
  %v647 = vpack.c.b16 %v543, %v539
  %v648 = vpack.c.b16 %v548, %v544
  %v649 = vpack.c.b16 %v549, %v545
  %v650 = vpack.c.b16 %v550, %v546
  %v651 = vpack.c.b16 %v551, %v547
  %v652 = vpack.c.b16 %v556, %v552
  %v653 = vpack.c.b16 %v557, %v553
  %v654 = vpack.c.b16 %v558, %v554
  %v655 = vpack.c.b16 %v559, %v555
  %752 = vmatpush.bf16.msra.mxu0 %v588
  %753 = vmatpush.bf16.msra.mxu0 %v584
  %754 = vmatpush.bf16.msra.mxu0 %v580
  %755 = vmatpush.bf16.msra.mxu0 %v576
  %756 = vmatpush.bf16.msra.mxu0 %v572
  %757 = vmatpush.bf16.msra.mxu0 %v568
  %758 = vmatpush.bf16.msra.mxu0 %v564
  %759 = vmatpush.bf16.msra.mxu0 %v560
  %760 = vmatmul.bf16.gmra.mxu0 %v224
  %v761 = vpop.f32.mrf.mxu0
  %v762 = vadd.f32 0.0, %v761
  %v763 = vpop.f32.mrf.mxu0
  %v764 = vadd.f32 0.0, %v763
  %765 = vmatmul.bf16.gmra.mxu0 %v227
  %v766 = vpop.f32.mrf.mxu0
  %v767 = vadd.f32 0.0, %v766
  %v768 = vpop.f32.mrf.mxu0
  %v769 = vadd.f32 0.0, %v768
  %770 = vmatmul.bf16.gmra.mxu0 %v230
  %v771 = vpop.f32.mrf.mxu0
  %v772 = vadd.f32 0.0, %v771
  %v773 = vpop.f32.mrf.mxu0
  %v774 = vadd.f32 0.0, %v773
  %775 = vmatmul.bf16.gmra.mxu0 %v233
  %v776 = vpop.f32.mrf.mxu0
  %v777 = vadd.f32 0.0, %v776
  %v778 = vpop.f32.mrf.mxu0
  %v779 = vadd.f32 0.0, %v778
  %780 = vmatmul.bf16.gmra.mxu0 %v236
  %v781 = vpop.f32.mrf.mxu0
  %v782 = vadd.f32 0.0, %v781
  %v783 = vpop.f32.mrf.mxu0
  %v784 = vadd.f32 0.0, %v783
  %785 = vmatmul.bf16.gmra.mxu0 %v239
  %v786 = vpop.f32.mrf.mxu0
  %v787 = vadd.f32 0.0, %v786
  %v788 = vpop.f32.mrf.mxu0
  %v789 = vadd.f32 0.0, %v788
  %790 = vmatmul.bf16.gmra.mxu0 %v242
  %v791 = vpop.f32.mrf.mxu0
  %v792 = vadd.f32 0.0, %v791
  %v793 = vpop.f32.mrf.mxu0
  %v794 = vadd.f32 0.0, %v793
  %795 = vmatmul.bf16.gmra.mxu0 %v245
  %v796 = vpop.f32.mrf.mxu0
  %v797 = vadd.f32 0.0, %v796
  %v798 = vpop.f32.mrf.mxu0
  %v799 = vadd.f32 0.0, %v798
  %800 = vdwg.mxu0
  %801 = vmatpush.bf16.msra.mxu0 %v620
  %802 = vmatpush.bf16.msra.mxu0 %v616
  %803 = vmatpush.bf16.msra.mxu0 %v612
  %804 = vmatpush.bf16.msra.mxu0 %v608
  %805 = vmatpush.bf16.msra.mxu0 %v604
  %806 = vmatpush.bf16.msra.mxu0 %v600
  %807 = vmatpush.bf16.msra.mxu0 %v596
  %808 = vmatpush.bf16.msra.mxu0 %v592
  %809 = vmatmul.bf16.gmra.mxu0 %v225
  %v810 = vpop.f32.mrf.mxu0
  %v811 = vadd.f32 %v762, %v810
  %v812 = vpop.f32.mrf.mxu0
  %v813 = vadd.f32 %v764, %v812
  %814 = vmatmul.bf16.gmra.mxu0 %v228
  %v815 = vpop.f32.mrf.mxu0
  %v816 = vadd.f32 %v767, %v815
  %v817 = vpop.f32.mrf.mxu0
  %v818 = vadd.f32 %v769, %v817
  %819 = vmatmul.bf16.gmra.mxu0 %v231
  %v820 = vpop.f32.mrf.mxu0
  %v821 = vadd.f32 %v772, %v820
  %v822 = vpop.f32.mrf.mxu0
  %v823 = vadd.f32 %v774, %v822
  %824 = vmatmul.bf16.gmra.mxu0 %v234
  %v825 = vpop.f32.mrf.mxu0
  %v826 = vadd.f32 %v777, %v825
  %v827 = vpop.f32.mrf.mxu0
  %v828 = vadd.f32 %v779, %v827
  %829 = vmatmul.bf16.gmra.mxu0 %v237
  %v830 = vpop.f32.mrf.mxu0
  %v831 = vadd.f32 %v782, %v830
  %v832 = vpop.f32.mrf.mxu0
  %v833 = vadd.f32 %v784, %v832
  %834 = vmatmul.bf16.gmra.mxu0 %v240
  %v835 = vpop.f32.mrf.mxu0
  %v836 = vadd.f32 %v787, %v835
  %v837 = vpop.f32.mrf.mxu0
  %v838 = vadd.f32 %v789, %v837
  %839 = vmatmul.bf16.gmra.mxu0 %v243
  %v840 = vpop.f32.mrf.mxu0
  %v841 = vadd.f32 %v792, %v840
  %v842 = vpop.f32.mrf.mxu0
  %v843 = vadd.f32 %v794, %v842
  %844 = vmatmul.bf16.gmra.mxu0 %v246
  %v845 = vpop.f32.mrf.mxu0
  %v846 = vadd.f32 %v797, %v845
  %v847 = vpop.f32.mrf.mxu0
  %v848 = vadd.f32 %v799, %v847
  %849 = vdwg.mxu0
  %850 = vmatpush.bf16.msra.mxu0 %v652
  %851 = vmatpush.bf16.msra.mxu0 %v648
  %852 = vmatpush.bf16.msra.mxu0 %v644
  %853 = vmatpush.bf16.msra.mxu0 %v640
  %854 = vmatpush.bf16.msra.mxu0 %v636
  %855 = vmatpush.bf16.msra.mxu0 %v632
  %856 = vmatpush.bf16.msra.mxu0 %v628
  %857 = vmatpush.bf16.msra.mxu0 %v624
  %858 = vmatmul.bf16.gmra.mxu0 %v226
  %v859 = vpop.f32.mrf.mxu0
  %v860 = vadd.f32 %v811, %v859
  %v861 = vpop.f32.mrf.mxu0
  %v862 = vadd.f32 %v813, %v861
  %863 = vmatmul.bf16.gmra.mxu0 %v229
  %v864 = vpop.f32.mrf.mxu0
  %v865 = vadd.f32 %v816, %v864
  %v866 = vpop.f32.mrf.mxu0
  %v867 = vadd.f32 %v818, %v866
  %868 = vmatmul.bf16.gmra.mxu0 %v232
  %v869 = vpop.f32.mrf.mxu0
  %v870 = vadd.f32 %v821, %v869
  %v871 = vpop.f32.mrf.mxu0
  %v872 = vadd.f32 %v823, %v871
  %873 = vmatmul.bf16.gmra.mxu0 %v235
  %v874 = vpop.f32.mrf.mxu0
  %v875 = vadd.f32 %v826, %v874
  %v876 = vpop.f32.mrf.mxu0
  %v877 = vadd.f32 %v828, %v876
  %878 = vmatmul.bf16.gmra.mxu0 %v238
  %v879 = vpop.f32.mrf.mxu0
  %v880 = vadd.f32 %v831, %v879
  %v881 = vpop.f32.mrf.mxu0
  %v882 = vadd.f32 %v833, %v881
  %883 = vmatmul.bf16.gmra.mxu0 %v241
  %v884 = vpop.f32.mrf.mxu0
  %v885 = vadd.f32 %v836, %v884
  %v886 = vpop.f32.mrf.mxu0
  %v887 = vadd.f32 %v838, %v886
  %888 = vmatmul.bf16.gmra.mxu0 %v244
  %v889 = vpop.f32.mrf.mxu0
  %v890 = vadd.f32 %v841, %v889
  %v891 = vpop.f32.mrf.mxu0
  %v892 = vadd.f32 %v843, %v891
  %893 = vmatmul.bf16.gmra.mxu0 %v247
  %v894 = vpop.f32.mrf.mxu0
  %v895 = vadd.f32 %v846, %v894
  %v896 = vpop.f32.mrf.mxu0
  %v897 = vadd.f32 %v848, %v896
  %898 = vdwg.mxu0
  %899 = vmatpush.bf16.msra.mxu0 %v589
  %900 = vmatpush.bf16.msra.mxu0 %v585
  %901 = vmatpush.bf16.msra.mxu0 %v581
  %902 = vmatpush.bf16.msra.mxu0 %v577
  %903 = vmatpush.bf16.msra.mxu0 %v573
  %904 = vmatpush.bf16.msra.mxu0 %v569
  %905 = vmatpush.bf16.msra.mxu0 %v565
  %906 = vmatpush.bf16.msra.mxu0 %v561
  %907 = vmatmul.bf16.gmra.mxu0 %v224
  %v908 = vpop.f32.mrf.mxu0
  %v909 = vadd.f32 0.0, %v908
  %v910 = vpop.f32.mrf.mxu0
  %v911 = vadd.f32 0.0, %v910
  %912 = vmatmul.bf16.gmra.mxu0 %v227
  %v913 = vpop.f32.mrf.mxu0
  %v914 = vadd.f32 0.0, %v913
  %v915 = vpop.f32.mrf.mxu0
  %v916 = vadd.f32 0.0, %v915
  %917 = vmatmul.bf16.gmra.mxu0 %v230
  %v918 = vpop.f32.mrf.mxu0
  %v919 = vadd.f32 0.0, %v918
  %v920 = vpop.f32.mrf.mxu0
  %v921 = vadd.f32 0.0, %v920
  %922 = vmatmul.bf16.gmra.mxu0 %v233
  %v923 = vpop.f32.mrf.mxu0
  %v924 = vadd.f32 0.0, %v923
  %v925 = vpop.f32.mrf.mxu0
  %v926 = vadd.f32 0.0, %v925
  %927 = vmatmul.bf16.gmra.mxu0 %v236
  %v928 = vpop.f32.mrf.mxu0
  %v929 = vadd.f32 0.0, %v928
  %v930 = vpop.f32.mrf.mxu0
  %v931 = vadd.f32 0.0, %v930
  %932 = vmatmul.bf16.gmra.mxu0 %v239
  %v933 = vpop.f32.mrf.mxu0
  %v934 = vadd.f32 0.0, %v933
  %v935 = vpop.f32.mrf.mxu0
  %v936 = vadd.f32 0.0, %v935
  %937 = vmatmul.bf16.gmra.mxu0 %v242
  %v938 = vpop.f32.mrf.mxu0
  %v939 = vadd.f32 0.0, %v938
  %v940 = vpop.f32.mrf.mxu0
  %v941 = vadd.f32 0.0, %v940
  %942 = vmatmul.bf16.gmra.mxu0 %v245
  %v943 = vpop.f32.mrf.mxu0
  %v944 = vadd.f32 0.0, %v943
  %v945 = vpop.f32.mrf.mxu0
  %v946 = vadd.f32 0.0, %v945
  %947 = vdwg.mxu0
  %948 = vmatpush.bf16.msra.mxu0 %v621
  %949 = vmatpush.bf16.msra.mxu0 %v617
  %950 = vmatpush.bf16.msra.mxu0 %v613
  %951 = vmatpush.bf16.msra.mxu0 %v609
  %952 = vmatpush.bf16.msra.mxu0 %v605
  %953 = vmatpush.bf16.msra.mxu0 %v601
  %954 = vmatpush.bf16.msra.mxu0 %v597
  %955 = vmatpush.bf16.msra.mxu0 %v593
  %956 = vmatmul.bf16.gmra.mxu0 %v225
  %v957 = vpop.f32.mrf.mxu0
  %v958 = vadd.f32 %v909, %v957
  %v959 = vpop.f32.mrf.mxu0
  %v960 = vadd.f32 %v911, %v959
  %961 = vmatmul.bf16.gmra.mxu0 %v228
  %v962 = vpop.f32.mrf.mxu0
  %v963 = vadd.f32 %v914, %v962
  %v964 = vpop.f32.mrf.mxu0
  %v965 = vadd.f32 %v916, %v964
  %966 = vmatmul.bf16.gmra.mxu0 %v231
  %v967 = vpop.f32.mrf.mxu0
  %v968 = vadd.f32 %v919, %v967
  %v969 = vpop.f32.mrf.mxu0
  %v970 = vadd.f32 %v921, %v969
  %971 = vmatmul.bf16.gmra.mxu0 %v234
  %v972 = vpop.f32.mrf.mxu0
  %v973 = vadd.f32 %v924, %v972
  %v974 = vpop.f32.mrf.mxu0
  %v975 = vadd.f32 %v926, %v974
  %976 = vmatmul.bf16.gmra.mxu0 %v237
  %v977 = vpop.f32.mrf.mxu0
  %v978 = vadd.f32 %v929, %v977
  %v979 = vpop.f32.mrf.mxu0
  %v980 = vadd.f32 %v931, %v979
  %981 = vmatmul.bf16.gmra.mxu0 %v240
  %v982 = vpop.f32.mrf.mxu0
  %v983 = vadd.f32 %v934, %v982
  %v984 = vpop.f32.mrf.mxu0
  %v985 = vadd.f32 %v936, %v984
  %986 = vmatmul.bf16.gmra.mxu0 %v243
  %v987 = vpop.f32.mrf.mxu0
  %v988 = vadd.f32 %v939, %v987
  %v989 = vpop.f32.mrf.mxu0
  %v990 = vadd.f32 %v941, %v989
  %991 = vmatmul.bf16.gmra.mxu0 %v246
  %v992 = vpop.f32.mrf.mxu0
  %v993 = vadd.f32 %v944, %v992
  %v994 = vpop.f32.mrf.mxu0
  %v995 = vadd.f32 %v946, %v994
  %996 = vdwg.mxu0
  %997 = vmatpush.bf16.msra.mxu0 %v653
  %998 = vmatpush.bf16.msra.mxu0 %v649
  %999 = vmatpush.bf16.msra.mxu0 %v645
  %1000 = vmatpush.bf16.msra.mxu0 %v641
  %1001 = vmatpush.bf16.msra.mxu0 %v637
  %1002 = vmatpush.bf16.msra.mxu0 %v633
  %1003 = vmatpush.bf16.msra.mxu0 %v629
  %1004 = vmatpush.bf16.msra.mxu0 %v625
  %1005 = vmatmul.bf16.gmra.mxu0 %v226
  %v1006 = vpop.f32.mrf.mxu0
  %v1007 = vadd.f32 %v958, %v1006
  %v1008 = vpop.f32.mrf.mxu0
  %v1009 = vadd.f32 %v960, %v1008
  %1010 = vmatmul.bf16.gmra.mxu0 %v229
  %v1011 = vpop.f32.mrf.mxu0
  %v1012 = vadd.f32 %v963, %v1011
  %v1013 = vpop.f32.mrf.mxu0
  %v1014 = vadd.f32 %v965, %v1013
  %1015 = vmatmul.bf16.gmra.mxu0 %v232
  %v1016 = vpop.f32.mrf.mxu0
  %v1017 = vadd.f32 %v968, %v1016
  %v1018 = vpop.f32.mrf.mxu0
  %v1019 = vadd.f32 %v970, %v1018
  %1020 = vmatmul.bf16.gmra.mxu0 %v235
  %v1021 = vpop.f32.mrf.mxu0
  %v1022 = vadd.f32 %v973, %v1021
  %v1023 = vpop.f32.mrf.mxu0
  %v1024 = vadd.f32 %v975, %v1023
  %1025 = vmatmul.bf16.gmra.mxu0 %v238
  %v1026 = vpop.f32.mrf.mxu0
  %v1027 = vadd.f32 %v978, %v1026
  %v1028 = vpop.f32.mrf.mxu0
  %v1029 = vadd.f32 %v980, %v1028
  %1030 = vmatmul.bf16.gmra.mxu0 %v241
  %v1031 = vpop.f32.mrf.mxu0
  %v1032 = vadd.f32 %v983, %v1031
  %v1033 = vpop.f32.mrf.mxu0
  %v1034 = vadd.f32 %v985, %v1033
  %1035 = vmatmul.bf16.gmra.mxu0 %v244
  %v1036 = vpop.f32.mrf.mxu0
  %v1037 = vadd.f32 %v988, %v1036
  %v1038 = vpop.f32.mrf.mxu0
  %v1039 = vadd.f32 %v990, %v1038
  %1040 = vmatmul.bf16.gmra.mxu0 %v247
  %v1041 = vpop.f32.mrf.mxu0
  %v1042 = vadd.f32 %v993, %v1041
  %v1043 = vpop.f32.mrf.mxu0
  %v1044 = vadd.f32 %v995, %v1043
  %1045 = vdwg.mxu0
  %1046 = vmatpush.bf16.msra.mxu0 %v590
  %1047 = vmatpush.bf16.msra.mxu0 %v586
  %1048 = vmatpush.bf16.msra.mxu0 %v582
  %1049 = vmatpush.bf16.msra.mxu0 %v578
  %1050 = vmatpush.bf16.msra.mxu0 %v574
  %1051 = vmatpush.bf16.msra.mxu0 %v570
  %1052 = vmatpush.bf16.msra.mxu0 %v566
  %1053 = vmatpush.bf16.msra.mxu0 %v562
  %1054 = vmatmul.bf16.gmra.mxu0 %v224
  %v1055 = vpop.f32.mrf.mxu0
  %v1056 = vadd.f32 0.0, %v1055
  %v1057 = vpop.f32.mrf.mxu0
  %v1058 = vadd.f32 0.0, %v1057
  %1059 = vmatmul.bf16.gmra.mxu0 %v227
  %v1060 = vpop.f32.mrf.mxu0
  %v1061 = vadd.f32 0.0, %v1060
  %v1062 = vpop.f32.mrf.mxu0
  %v1063 = vadd.f32 0.0, %v1062
  %1064 = vmatmul.bf16.gmra.mxu0 %v230
  %v1065 = vpop.f32.mrf.mxu0
  %v1066 = vadd.f32 0.0, %v1065
  %v1067 = vpop.f32.mrf.mxu0
  %v1068 = vadd.f32 0.0, %v1067
  %1069 = vmatmul.bf16.gmra.mxu0 %v233
  %v1070 = vpop.f32.mrf.mxu0
  %v1071 = vadd.f32 0.0, %v1070
  %v1072 = vpop.f32.mrf.mxu0
  %v1073 = vadd.f32 0.0, %v1072
  %1074 = vmatmul.bf16.gmra.mxu0 %v236
  %v1075 = vpop.f32.mrf.mxu0
  %v1076 = vadd.f32 0.0, %v1075
  %v1077 = vpop.f32.mrf.mxu0
  %v1078 = vadd.f32 0.0, %v1077
  %1079 = vmatmul.bf16.gmra.mxu0 %v239
  %v1080 = vpop.f32.mrf.mxu0
  %v1081 = vadd.f32 0.0, %v1080
  %v1082 = vpop.f32.mrf.mxu0
  %v1083 = vadd.f32 0.0, %v1082
  %1084 = vmatmul.bf16.gmra.mxu0 %v242
  %v1085 = vpop.f32.mrf.mxu0
  %v1086 = vadd.f32 0.0, %v1085
  %v1087 = vpop.f32.mrf.mxu0
  %v1088 = vadd.f32 0.0, %v1087
  %1089 = vmatmul.bf16.gmra.mxu0 %v245
  %v1090 = vpop.f32.mrf.mxu0
  %v1091 = vadd.f32 0.0, %v1090
  %v1092 = vpop.f32.mrf.mxu0
  %v1093 = vadd.f32 0.0, %v1092
  %1094 = vdwg.mxu0
  %1095 = vmatpush.bf16.msra.mxu0 %v622
  %1096 = vmatpush.bf16.msra.mxu0 %v618
  %1097 = vmatpush.bf16.msra.mxu0 %v614
  %1098 = vmatpush.bf16.msra.mxu0 %v610
  %1099 = vmatpush.bf16.msra.mxu0 %v606
  %1100 = vmatpush.bf16.msra.mxu0 %v602
  %1101 = vmatpush.bf16.msra.mxu0 %v598
  %1102 = vmatpush.bf16.msra.mxu0 %v594
  %1103 = vmatmul.bf16.gmra.mxu0 %v225
  %v1104 = vpop.f32.mrf.mxu0
  %v1105 = vadd.f32 %v1056, %v1104
  %v1106 = vpop.f32.mrf.mxu0
  %v1107 = vadd.f32 %v1058, %v1106
  %1108 = vmatmul.bf16.gmra.mxu0 %v228
  %v1109 = vpop.f32.mrf.mxu0
  %v1110 = vadd.f32 %v1061, %v1109
  %v1111 = vpop.f32.mrf.mxu0
  %v1112 = vadd.f32 %v1063, %v1111
  %1113 = vmatmul.bf16.gmra.mxu0 %v231
  %v1114 = vpop.f32.mrf.mxu0
  %v1115 = vadd.f32 %v1066, %v1114
  %v1116 = vpop.f32.mrf.mxu0
  %v1117 = vadd.f32 %v1068, %v1116
  %1118 = vmatmul.bf16.gmra.mxu0 %v234
  %v1119 = vpop.f32.mrf.mxu0
  %v1120 = vadd.f32 %v1071, %v1119
  %v1121 = vpop.f32.mrf.mxu0
  %v1122 = vadd.f32 %v1073, %v1121
  %1123 = vmatmul.bf16.gmra.mxu0 %v237
  %v1124 = vpop.f32.mrf.mxu0
  %v1125 = vadd.f32 %v1076, %v1124
  %v1126 = vpop.f32.mrf.mxu0
  %v1127 = vadd.f32 %v1078, %v1126
  %1128 = vmatmul.bf16.gmra.mxu0 %v240
  %v1129 = vpop.f32.mrf.mxu0
  %v1130 = vadd.f32 %v1081, %v1129
  %v1131 = vpop.f32.mrf.mxu0
  %v1132 = vadd.f32 %v1083, %v1131
  %1133 = vmatmul.bf16.gmra.mxu0 %v243
  %v1134 = vpop.f32.mrf.mxu0
  %v1135 = vadd.f32 %v1086, %v1134
  %v1136 = vpop.f32.mrf.mxu0
  %v1137 = vadd.f32 %v1088, %v1136
  %1138 = vmatmul.bf16.gmra.mxu0 %v246
  %v1139 = vpop.f32.mrf.mxu0
  %v1140 = vadd.f32 %v1091, %v1139
  %v1141 = vpop.f32.mrf.mxu0
  %v1142 = vadd.f32 %v1093, %v1141
  %1143 = vdwg.mxu0
  %1144 = vmatpush.bf16.msra.mxu0 %v654
  %1145 = vmatpush.bf16.msra.mxu0 %v650
  %1146 = vmatpush.bf16.msra.mxu0 %v646
  %1147 = vmatpush.bf16.msra.mxu0 %v642
  %1148 = vmatpush.bf16.msra.mxu0 %v638
  %1149 = vmatpush.bf16.msra.mxu0 %v634
  %1150 = vmatpush.bf16.msra.mxu0 %v630
  %1151 = vmatpush.bf16.msra.mxu0 %v626
  %1152 = vmatmul.bf16.gmra.mxu0 %v226
  %v1153 = vpop.f32.mrf.mxu0
  %v1154 = vadd.f32 %v1105, %v1153
  %v1155 = vpop.f32.mrf.mxu0
  %v1156 = vadd.f32 %v1107, %v1155
  %1157 = vmatmul.bf16.gmra.mxu0 %v229
  %v1158 = vpop.f32.mrf.mxu0
  %v1159 = vadd.f32 %v1110, %v1158
  %v1160 = vpop.f32.mrf.mxu0
  %v1161 = vadd.f32 %v1112, %v1160
  %1162 = vmatmul.bf16.gmra.mxu0 %v232
  %v1163 = vpop.f32.mrf.mxu0
  %v1164 = vadd.f32 %v1115, %v1163
  %v1165 = vpop.f32.mrf.mxu0
  %v1166 = vadd.f32 %v1117, %v1165
  %1167 = vmatmul.bf16.gmra.mxu0 %v235
  %v1168 = vpop.f32.mrf.mxu0
  %v1169 = vadd.f32 %v1120, %v1168
  %v1170 = vpop.f32.mrf.mxu0
  %v1171 = vadd.f32 %v1122, %v1170
  %1172 = vmatmul.bf16.gmra.mxu0 %v238
  %v1173 = vpop.f32.mrf.mxu0
  %v1174 = vadd.f32 %v1125, %v1173
  %v1175 = vpop.f32.mrf.mxu0
  %v1176 = vadd.f32 %v1127, %v1175
  %1177 = vmatmul.bf16.gmra.mxu0 %v241
  %v1178 = vpop.f32.mrf.mxu0
  %v1179 = vadd.f32 %v1130, %v1178
  %v1180 = vpop.f32.mrf.mxu0
  %v1181 = vadd.f32 %v1132, %v1180
  %1182 = vmatmul.bf16.gmra.mxu0 %v244
  %v1183 = vpop.f32.mrf.mxu0
  %v1184 = vadd.f32 %v1135, %v1183
  %v1185 = vpop.f32.mrf.mxu0
  %v1186 = vadd.f32 %v1137, %v1185
  %1187 = vmatmul.bf16.gmra.mxu0 %v247
  %v1188 = vpop.f32.mrf.mxu0
  %v1189 = vadd.f32 %v1140, %v1188
  %v1190 = vpop.f32.mrf.mxu0
  %v1191 = vadd.f32 %v1142, %v1190
  %1192 = vdwg.mxu0
  %1193 = vmatpush.bf16.msra.mxu0 %v591
  %1194 = vmatpush.bf16.msra.mxu0 %v587
  %1195 = vmatpush.bf16.msra.mxu0 %v583
  %1196 = vmatpush.bf16.msra.mxu0 %v579
  %1197 = vmatpush.bf16.msra.mxu0 %v575
  %1198 = vmatpush.bf16.msra.mxu0 %v571
  %1199 = vmatpush.bf16.msra.mxu0 %v567
  %1200 = vmatpush.bf16.msra.mxu0 %v563
  %1201 = vmatmul.bf16.gmra.mxu0 %v224
  %v1202 = vpop.f32.mrf.mxu0
  %v1203 = vadd.f32 0.0, %v1202
  %v1204 = vpop.f32.mrf.mxu0
  %v1205 = vadd.f32 0.0, %v1204
  %1206 = vmatmul.bf16.gmra.mxu0 %v227
  %v1207 = vpop.f32.mrf.mxu0
  %v1208 = vadd.f32 0.0, %v1207
  %v1209 = vpop.f32.mrf.mxu0
  %v1210 = vadd.f32 0.0, %v1209
  %1211 = vmatmul.bf16.gmra.mxu0 %v230
  %v1212 = vpop.f32.mrf.mxu0
  %v1213 = vadd.f32 0.0, %v1212
  %v1214 = vpop.f32.mrf.mxu0
  %v1215 = vadd.f32 0.0, %v1214
  %1216 = vmatmul.bf16.gmra.mxu0 %v233
  %v1217 = vpop.f32.mrf.mxu0
  %v1218 = vadd.f32 0.0, %v1217
  %v1219 = vpop.f32.mrf.mxu0
  %v1220 = vadd.f32 0.0, %v1219
  %1221 = vmatmul.bf16.gmra.mxu0 %v236
  %v1222 = vpop.f32.mrf.mxu0
  %v1223 = vadd.f32 0.0, %v1222
  %v1224 = vpop.f32.mrf.mxu0
  %v1225 = vadd.f32 0.0, %v1224
  %1226 = vmatmul.bf16.gmra.mxu0 %v239
  %v1227 = vpop.f32.mrf.mxu0
  %v1228 = vadd.f32 0.0, %v1227
  %v1229 = vpop.f32.mrf.mxu0
  %v1230 = vadd.f32 0.0, %v1229
  %1231 = vmatmul.bf16.gmra.mxu0 %v242
  %v1232 = vpop.f32.mrf.mxu0
  %v1233 = vadd.f32 0.0, %v1232
  %v1234 = vpop.f32.mrf.mxu0
  %v1235 = vadd.f32 0.0, %v1234
  %1236 = vmatmul.bf16.gmra.mxu0 %v245
  %v1237 = vpop.f32.mrf.mxu0
  %v1238 = vadd.f32 0.0, %v1237
  %v1239 = vpop.f32.mrf.mxu0
  %v1240 = vadd.f32 0.0, %v1239
  %1241 = vdwg.mxu0
  %1242 = vmatpush.bf16.msra.mxu0 %v623
  %1243 = vmatpush.bf16.msra.mxu0 %v619
  %1244 = vmatpush.bf16.msra.mxu0 %v615
  %1245 = vmatpush.bf16.msra.mxu0 %v611
  %1246 = vmatpush.bf16.msra.mxu0 %v607
  %1247 = vmatpush.bf16.msra.mxu0 %v603
  %1248 = vmatpush.bf16.msra.mxu0 %v599
  %1249 = vmatpush.bf16.msra.mxu0 %v595
  %1250 = vmatmul.bf16.gmra.mxu0 %v225
  %v1251 = vpop.f32.mrf.mxu0
  %v1252 = vadd.f32 %v1203, %v1251
  %v1253 = vpop.f32.mrf.mxu0
  %v1254 = vadd.f32 %v1205, %v1253
  %1255 = vmatmul.bf16.gmra.mxu0 %v228
  %v1256 = vpop.f32.mrf.mxu0
  %v1257 = vadd.f32 %v1208, %v1256
  %v1258 = vpop.f32.mrf.mxu0
  %v1259 = vadd.f32 %v1210, %v1258
  %1260 = vmatmul.bf16.gmra.mxu0 %v231
  %v1261 = vpop.f32.mrf.mxu0
  %v1262 = vadd.f32 %v1213, %v1261
  %v1263 = vpop.f32.mrf.mxu0
  %v1264 = vadd.f32 %v1215, %v1263
  %1265 = vmatmul.bf16.gmra.mxu0 %v234
  %v1266 = vpop.f32.mrf.mxu0
  %v1267 = vadd.f32 %v1218, %v1266
  %v1268 = vpop.f32.mrf.mxu0
  %v1269 = vadd.f32 %v1220, %v1268
  %1270 = vmatmul.bf16.gmra.mxu0 %v237
  %v1271 = vpop.f32.mrf.mxu0
  %v1272 = vadd.f32 %v1223, %v1271
  %v1273 = vpop.f32.mrf.mxu0
  %v1274 = vadd.f32 %v1225, %v1273
  %1275 = vmatmul.bf16.gmra.mxu0 %v240
  %v1276 = vpop.f32.mrf.mxu0
  %v1277 = vadd.f32 %v1228, %v1276
  %v1278 = vpop.f32.mrf.mxu0
  %v1279 = vadd.f32 %v1230, %v1278
  %1280 = vmatmul.bf16.gmra.mxu0 %v243
  %v1281 = vpop.f32.mrf.mxu0
  %v1282 = vadd.f32 %v1233, %v1281
  %v1283 = vpop.f32.mrf.mxu0
  %v1284 = vadd.f32 %v1235, %v1283
  %1285 = vmatmul.bf16.gmra.mxu0 %v246
  %v1286 = vpop.f32.mrf.mxu0
  %v1287 = vadd.f32 %v1238, %v1286
  %v1288 = vpop.f32.mrf.mxu0
  %v1289 = vadd.f32 %v1240, %v1288
  %1290 = vdwg.mxu0
  %1291 = vmatpush.bf16.msra.mxu0 %v655
  %1292 = vmatpush.bf16.msra.mxu0 %v651
  %1293 = vmatpush.bf16.msra.mxu0 %v647
  %1294 = vmatpush.bf16.msra.mxu0 %v643
  %1295 = vmatpush.bf16.msra.mxu0 %v639
  %1296 = vmatpush.bf16.msra.mxu0 %v635
  %1297 = vmatpush.bf16.msra.mxu0 %v631
  %1298 = vmatpush.bf16.msra.mxu0 %v627
  %1299 = vmatmul.bf16.gmra.mxu0 %v226
  %v1300 = vpop.f32.mrf.mxu0
  %v1301 = vadd.f32 %v1252, %v1300
  %v1302 = vpop.f32.mrf.mxu0
  %v1303 = vadd.f32 %v1254, %v1302
  %1304 = vmatmul.bf16.gmra.mxu0 %v229
  %v1305 = vpop.f32.mrf.mxu0
  %v1306 = vadd.f32 %v1257, %v1305
  %v1307 = vpop.f32.mrf.mxu0
  %v1308 = vadd.f32 %v1259, %v1307
  %1309 = vmatmul.bf16.gmra.mxu0 %v232
  %v1310 = vpop.f32.mrf.mxu0
  %v1311 = vadd.f32 %v1262, %v1310
  %v1312 = vpop.f32.mrf.mxu0
  %v1313 = vadd.f32 %v1264, %v1312
  %1314 = vmatmul.bf16.gmra.mxu0 %v235
  %v1315 = vpop.f32.mrf.mxu0
  %v1316 = vadd.f32 %v1267, %v1315
  %v1317 = vpop.f32.mrf.mxu0
  %v1318 = vadd.f32 %v1269, %v1317
  %1319 = vmatmul.bf16.gmra.mxu0 %v238
  %v1320 = vpop.f32.mrf.mxu0
  %v1321 = vadd.f32 %v1272, %v1320
  %v1322 = vpop.f32.mrf.mxu0
  %v1323 = vadd.f32 %v1274, %v1322
  %1324 = vmatmul.bf16.gmra.mxu0 %v241
  %v1325 = vpop.f32.mrf.mxu0
  %v1326 = vadd.f32 %v1277, %v1325
  %v1327 = vpop.f32.mrf.mxu0
  %v1328 = vadd.f32 %v1279, %v1327
  %1329 = vmatmul.bf16.gmra.mxu0 %v244
  %v1330 = vpop.f32.mrf.mxu0
  %v1331 = vadd.f32 %v1282, %v1330
  %v1332 = vpop.f32.mrf.mxu0
  %v1333 = vadd.f32 %v1284, %v1332
  %1334 = vmatmul.bf16.gmra.mxu0 %v247
  %v1335 = vpop.f32.mrf.mxu0
  %v1336 = vadd.f32 %v1287, %v1335
  %v1337 = vpop.f32.mrf.mxu0
  %v1338 = vadd.f32 %v1289, %v1337
  %1339 = vdwg.mxu0
  %1340 = vst [vmem:[#allocation2] sm:$0xff] %v860
  %1341 = vst [vmem:[#allocation2 + $0x8] sm:$0xff] %v1007
  %1342 = vst [vmem:[#allocation2 + $0x10] sm:$0xff] %v1154
  %1343 = vst [vmem:[#allocation2 + $0x18] sm:$0xff] %v1301
  %1344 = vst [vmem:[#allocation2 + $0x20] sm:$0xff] %v862
  %1345 = vst [vmem:[#allocation2 + $0x28] sm:$0xff] %v1009
  %1346 = vst [vmem:[#allocation2 + $0x30] sm:$0xff] %v1156
  %1347 = vst [vmem:[#allocation2 + $0x38] sm:$0xff] %v1303
  %1348 = vst [vmem:[#allocation2 + $0x40] sm:$0xff] %v865
  %1349 = vst [vmem:[#allocation2 + $0x48] sm:$0xff] %v1012
  %1350 = vst [vmem:[#allocation2 + $0x50] sm:$0xff] %v1159
  %1351 = vst [vmem:[#allocation2 + $0x58] sm:$0xff] %v1306
  %1352 = vst [vmem:[#allocation2 + $0x60] sm:$0xff] %v867
  %1353 = vst [vmem:[#allocation2 + $0x68] sm:$0xff] %v1014
  %1354 = vst [vmem:[#allocation2 + $0x70] sm:$0xff] %v1161
  %1355 = vst [vmem:[#allocation2 + $0x78] sm:$0xff] %v1308
  %1356 = vst [vmem:[#allocation2 + $0x80] sm:$0xff] %v870
  %1357 = vst [vmem:[#allocation2 + $0x88] sm:$0xff] %v1017
  %1358 = vst [vmem:[#allocation2 + $0x90] sm:$0xff] %v1164
  %1359 = vst [vmem:[#allocation2 + $0x98] sm:$0xff] %v1311
  %1360 = vst [vmem:[#allocation2 + $0xa0] sm:$0xff] %v872
  %1361 = vst [vmem:[#allocation2 + $0xa8] sm:$0xff] %v1019
  %1362 = vst [vmem:[#allocation2 + $0xb0] sm:$0xff] %v1166
  %1363 = vst [vmem:[#allocation2 + $0xb8] sm:$0xff] %v1313
  %1364 = vst [vmem:[#allocation2 + $0xc0] sm:$0xff] %v875
  %1365 = vst [vmem:[#allocation2 + $0xc8] sm:$0xff] %v1022
  %1366 = vst [vmem:[#allocation2 + $0xd0] sm:$0xff] %v1169
  %1367 = vst [vmem:[#allocation2 + $0xd8] sm:$0xff] %v1316
  %1368 = vst [vmem:[#allocation2 + $0xe0] sm:$0xff] %v877
  %1369 = vst [vmem:[#allocation2 + $0xe8] sm:$0xff] %v1024
  %1370 = vst [vmem:[#allocation2 + $0xf0] sm:$0xff] %v1171
  %1371 = vst [vmem:[#allocation2 + $0xf8] sm:$0xff] %v1318
  %1372 = vst [vmem:[#allocation2 + $0x100] sm:$0xff] %v880
  %1373 = vst [vmem:[#allocation2 + $0x108] sm:$0xff] %v1027
  %1374 = vst [vmem:[#allocation2 + $0x110] sm:$0xff] %v1174
  %1375 = vst [vmem:[#allocation2 + $0x118] sm:$0xff] %v1321
  %1376 = vst [vmem:[#allocation2 + $0x120] sm:$0xff] %v882
  %1377 = vst [vmem:[#allocation2 + $0x128] sm:$0xff] %v1029
  %1378 = vst [vmem:[#allocation2 + $0x130] sm:$0xff] %v1176
  %1379 = vst [vmem:[#allocation2 + $0x138] sm:$0xff] %v1323
  %1380 = vst [vmem:[#allocation2 + $0x140] sm:$0xff] %v885
  %1381 = vst [vmem:[#allocation2 + $0x148] sm:$0xff] %v1032
  %1382 = vst [vmem:[#allocation2 + $0x150] sm:$0xff] %v1179
  %1383 = vst [vmem:[#allocation2 + $0x158] sm:$0xff] %v1326
  %1384 = vst [vmem:[#allocation2 + $0x160] sm:$0xff] %v887
  %1385 = vst [vmem:[#allocation2 + $0x168] sm:$0xff] %v1034
  %1386 = vst [vmem:[#allocation2 + $0x170] sm:$0xff] %v1181
  %1387 = vst [vmem:[#allocation2 + $0x178] sm:$0xff] %v1328
  %1388 = vst [vmem:[#allocation2 + $0x180] sm:$0xff] %v890
  %1389 = vst [vmem:[#allocation2 + $0x188] sm:$0xff] %v1037
  %1390 = vst [vmem:[#allocation2 + $0x190] sm:$0xff] %v1184
  %1391 = vst [vmem:[#allocation2 + $0x198] sm:$0xff] %v1331
  %1392 = vst [vmem:[#allocation2 + $0x1a0] sm:$0xff] %v892
  %1393 = vst [vmem:[#allocation2 + $0x1a8] sm:$0xff] %v1039
  %1394 = vst [vmem:[#allocation2 + $0x1b0] sm:$0xff] %v1186
  %1395 = vst [vmem:[#allocation2 + $0x1b8] sm:$0xff] %v1333
  %1396 = vst [vmem:[#allocation2 + $0x1c0] sm:$0xff] %v895
  %1397 = vst [vmem:[#allocation2 + $0x1c8] sm:$0xff] %v1042
  %1398 = vst [vmem:[#allocation2 + $0x1d0] sm:$0xff] %v1189
  %1399 = vst [vmem:[#allocation2 + $0x1d8] sm:$0xff] %v1336
  %1400 = vst [vmem:[#allocation2 + $0x1e0] sm:$0xff] %v897
  %1401 = vst [vmem:[#allocation2 + $0x1e8] sm:$0xff] %v1044
  %1402 = vst [vmem:[#allocation2 + $0x1f0] sm:$0xff] %v1191
  %1403 = vst [vmem:[#allocation2 + $0x1f8] sm:$0xff] %v1338
  %v1404 = vld [vmem:[#allocation2 + $0x180] sm:$0xff]
  %v1405 = vld [vmem:[#allocation2 + $0x1a0] sm:$0xff]
  %v1406 = vld [vmem:[#allocation2 + $0x1c0] sm:$0xff]
  %v1407 = vld [vmem:[#allocation2 + $0x1e0] sm:$0xff]
  %v1408 = vtanh.pop %v1404
  %v1409 = vtanh.pop %v1405
  %v1410 = vtanh.pop %v1406
  %v1411 = vtanh.pop %v1407
  %v1412 = vld [vmem:[#allocation2] sm:$0xff]
  %v1413 = vld [vmem:[#allocation2 + $0x20] sm:$0xff]
  %v1414 = vld [vmem:[#allocation2 + $0x40] sm:$0xff]
  %v1415 = vld [vmem:[#allocation2 + $0x60] sm:$0xff]
  %v1416 = vxor.u32 %v1412, 2147483648
  %v1417 = vxor.u32 %v1413, 2147483648
  %v1418 = vxor.u32 %v1414, 2147483648
  %v1419 = vxor.u32 %v1415, 2147483648
  %v1420 = vmul.f32 %v1416, 1.442695
  %v1421 = vpow.pop %v1420
  %v1422 = vmul.f32 %v1417, 1.442695
  %v1423 = vpow.pop %v1422
  %v1424 = vmul.f32 %v1418, 1.442695
  %v1425 = vpow.pop %v1424
  %v1426 = vmul.f32 %v1419, 1.442695
  %v1427 = vpow.pop %v1426
  %v1428 = vadd.f32 %v1421, 1.0
  %v1429 = vadd.f32 %v1423, 1.0
  %v1430 = vadd.f32 %v1425, 1.0
  %v1431 = vadd.f32 %v1427, 1.0
  %v1432 = vrcp.pop %v1428
  %v1433 = vmul.f32 %v1428, %v1432
  %v1434 = vsub.f32 1.0, %v1433
  %v1435 = vmul.f32 %v1432, %v1434
  %v1436 = vadd.f32 %v1432, %v1435
  %vm1437 = vweird.f32 %v1428
  %vm1438 = vweird.f32 %v1432
  %vm1439 = vmor %vm1437, %vm1438
  %v1440 = vsel %vm1439, %v1432, %v1436
  %v1441 = vand.u32 2147483647, %v1428
  %vm1442 = vcmp.eq.f32.partialorder %v1441, 8.507059e+37
  %v1443 = vand.u32 %v1428, 2147483648
  %v1444 = vor.u32 1.1754944e-38, %v1443
  %v1445 = vsel %vm1442, %v1444, %v1440
  %v1446 = vmul.f32 1.0, %v1445
  %v1447 = vrcp.pop %v1429
  %v1448 = vmul.f32 %v1429, %v1447
  %v1449 = vsub.f32 1.0, %v1448
  %v1450 = vmul.f32 %v1447, %v1449
  %v1451 = vadd.f32 %v1447, %v1450
  %vm1452 = vweird.f32 %v1429
  %vm1453 = vweird.f32 %v1447
  %vm1454 = vmor %vm1452, %vm1453
  %v1455 = vsel %vm1454, %v1447, %v1451
  %v1456 = vand.u32 2147483647, %v1429
  %vm1457 = vcmp.eq.f32.partialorder %v1456, 8.507059e+37
  %v1458 = vand.u32 %v1429, 2147483648
  %v1459 = vor.u32 1.1754944e-38, %v1458
  %v1460 = vsel %vm1457, %v1459, %v1455
  %v1461 = vmul.f32 1.0, %v1460
  %v1462 = vrcp.pop %v1430
  %v1463 = vmul.f32 %v1430, %v1462
  %v1464 = vsub.f32 1.0, %v1463
  %v1465 = vmul.f32 %v1462, %v1464
  %v1466 = vadd.f32 %v1462, %v1465
  %vm1467 = vweird.f32 %v1430
  %vm1468 = vweird.f32 %v1462
  %vm1469 = vmor %vm1467, %vm1468
  %v1470 = vsel %vm1469, %v1462, %v1466
  %v1471 = vand.u32 2147483647, %v1430
  %vm1472 = vcmp.eq.f32.partialorder %v1471, 8.507059e+37
  %v1473 = vand.u32 %v1430, 2147483648
  %v1474 = vor.u32 1.1754944e-38, %v1473
  %v1475 = vsel %vm1472, %v1474, %v1470
  %v1476 = vmul.f32 1.0, %v1475
  %v1477 = vrcp.pop %v1431
  %v1478 = vmul.f32 %v1431, %v1477
  %v1479 = vsub.f32 1.0, %v1478
  %v1480 = vmul.f32 %v1477, %v1479
  %v1481 = vadd.f32 %v1477, %v1480
  %vm1482 = vweird.f32 %v1431
  %vm1483 = vweird.f32 %v1477
  %vm1484 = vmor %vm1482, %vm1483
  %v1485 = vsel %vm1484, %v1477, %v1481
  %v1486 = vand.u32 2147483647, %v1431
  %vm1487 = vcmp.eq.f32.partialorder %v1486, 8.507059e+37
  %v1488 = vand.u32 %v1431, 2147483648
  %v1489 = vor.u32 1.1754944e-38, %v1488
  %v1490 = vsel %vm1487, %v1489, %v1485
  %v1491 = vmul.f32 1.0, %v1490
  %v1492 = vmul.f32 %v1446, %v1408
  %v1493 = vmul.f32 %v1461, %v1409
  %v1494 = vmul.f32 %v1476, %v1410
  %v1495 = vmul.f32 %v1491, %v1411
  %v1496 = vld [vmem:[#allocation2 + $0x80] sm:$0xff]
  %v1497 = vld [vmem:[#allocation2 + $0xa0] sm:$0xff]
  %v1498 = vld [vmem:[#allocation2 + $0xc0] sm:$0xff]
  %v1499 = vld [vmem:[#allocation2 + $0xe0] sm:$0xff]
  %v1500 = vxor.u32 %v1496, 2147483648
  %v1501 = vxor.u32 %v1497, 2147483648
  %v1502 = vxor.u32 %v1498, 2147483648
  %v1503 = vxor.u32 %v1499, 2147483648
  %v1504 = vmul.f32 %v1500, 1.442695
  %v1505 = vpow.pop %v1504
  %v1506 = vmul.f32 %v1501, 1.442695
  %v1507 = vpow.pop %v1506
  %v1508 = vmul.f32 %v1502, 1.442695
  %v1509 = vpow.pop %v1508
  %v1510 = vmul.f32 %v1503, 1.442695
  %v1511 = vpow.pop %v1510
  %v1512 = vadd.f32 %v1505, 1.0
  %v1513 = vadd.f32 %v1507, 1.0
  %v1514 = vadd.f32 %v1509, 1.0
  %v1515 = vadd.f32 %v1511, 1.0
  %v1516 = vrcp.pop %v1512
  %v1517 = vmul.f32 %v1512, %v1516
  %v1518 = vsub.f32 1.0, %v1517
  %v1519 = vmul.f32 %v1516, %v1518
  %v1520 = vadd.f32 %v1516, %v1519
  %vm1521 = vweird.f32 %v1512
  %vm1522 = vweird.f32 %v1516
  %vm1523 = vmor %vm1521, %vm1522
  %v1524 = vsel %vm1523, %v1516, %v1520
  %v1525 = vand.u32 2147483647, %v1512
  %vm1526 = vcmp.eq.f32.partialorder %v1525, 8.507059e+37
  %v1527 = vand.u32 %v1512, 2147483648
  %v1528 = vor.u32 1.1754944e-38, %v1527
  %v1529 = vsel %vm1526, %v1528, %v1524
  %v1530 = vmul.f32 1.0, %v1529
  %v1531 = vrcp.pop %v1513
  %v1532 = vmul.f32 %v1513, %v1531
  %v1533 = vsub.f32 1.0, %v1532
  %v1534 = vmul.f32 %v1531, %v1533
  %v1535 = vadd.f32 %v1531, %v1534
  %vm1536 = vweird.f32 %v1513
  %vm1537 = vweird.f32 %v1531
  %vm1538 = vmor %vm1536, %vm1537
  %v1539 = vsel %vm1538, %v1531, %v1535
  %v1540 = vand.u32 2147483647, %v1513
  %vm1541 = vcmp.eq.f32.partialorder %v1540, 8.507059e+37
  %v1542 = vand.u32 %v1513, 2147483648
  %v1543 = vor.u32 1.1754944e-38, %v1542
  %v1544 = vsel %vm1541, %v1543, %v1539
  %v1545 = vmul.f32 1.0, %v1544
  %v1546 = vrcp.pop %v1514
  %v1547 = vmul.f32 %v1514, %v1546
  %v1548 = vsub.f32 1.0, %v1547
  %v1549 = vmul.f32 %v1546, %v1548
  %v1550 = vadd.f32 %v1546, %v1549
  %vm1551 = vweird.f32 %v1514
  %vm1552 = vweird.f32 %v1546
  %vm1553 = vmor %vm1551, %vm1552
  %v1554 = vsel %vm1553, %v1546, %v1550
  %v1555 = vand.u32 2147483647, %v1514
  %vm1556 = vcmp.eq.f32.partialorder %v1555, 8.507059e+37
  %v1557 = vand.u32 %v1514, 2147483648
  %v1558 = vor.u32 1.1754944e-38, %v1557
  %v1559 = vsel %vm1556, %v1558, %v1554
  %v1560 = vmul.f32 1.0, %v1559
  %v1561 = vrcp.pop %v1515
  %v1562 = vmul.f32 %v1515, %v1561
  %v1563 = vsub.f32 1.0, %v1562
  %v1564 = vmul.f32 %v1561, %v1563
  %v1565 = vadd.f32 %v1561, %v1564
  %vm1566 = vweird.f32 %v1515
  %vm1567 = vweird.f32 %v1561
  %vm1568 = vmor %vm1566, %vm1567
  %v1569 = vsel %vm1568, %v1561, %v1565
  %v1570 = vand.u32 2147483647, %v1515
  %vm1571 = vcmp.eq.f32.partialorder %v1570, 8.507059e+37
  %v1572 = vand.u32 %v1515, 2147483648
  %v1573 = vor.u32 1.1754944e-38, %v1572
  %v1574 = vsel %vm1571, %v1573, %v1569
  %v1575 = vmul.f32 1.0, %v1574
  %v1576 = vld [vmem:[%s2] sm:$0xff]
  %v1577 = vld [vmem:[%s2 + $0x20] sm:$0xff]
  %v1578 = vld [vmem:[%s2 + $0x40] sm:$0xff]
  %v1579 = vld [vmem:[%s2 + $0x60] sm:$0xff]
  %v1580 = vmul.f32 %v1530, %v1576
  %v1581 = vmul.f32 %v1545, %v1577
  %v1582 = vmul.f32 %v1560, %v1578
  %v1583 = vmul.f32 %v1575, %v1579
  %v1584 = vadd.f32 %v1580, %v1492
  %v1585 = vadd.f32 %v1581, %v1493
  %v1586 = vadd.f32 %v1582, %v1494
  %v1587 = vadd.f32 %v1583, %v1495
  %1588 = vst [vmem:[%s4] sm:$0xff] %v1584
  %1589 = vst [vmem:[%s4 + $0x20] sm:$0xff] %v1585
  %1590 = vst [vmem:[%s4 + $0x40] sm:$0xff] %v1586
  %1591 = vst [vmem:[%s4 + $0x60] sm:$0xff] %v1587
  %v1592 = vld [vmem:[#allocation2 + $0x100] sm:$0xff]
  %v1593 = vld [vmem:[#allocation2 + $0x120] sm:$0xff]
  %v1594 = vld [vmem:[#allocation2 + $0x140] sm:$0xff]
  %v1595 = vld [vmem:[#allocation2 + $0x160] sm:$0xff]
  %v1596 = vxor.u32 %v1592, 2147483648
  %v1597 = vxor.u32 %v1593, 2147483648
  %v1598 = vxor.u32 %v1594, 2147483648
  %v1599 = vxor.u32 %v1595, 2147483648
  %v1600 = vmul.f32 %v1596, 1.442695
  %v1601 = vpow.pop %v1600
  %v1602 = vmul.f32 %v1597, 1.442695
  %v1603 = vpow.pop %v1602
  %v1604 = vmul.f32 %v1598, 1.442695
  %v1605 = vpow.pop %v1604
  %v1606 = vmul.f32 %v1599, 1.442695
  %v1607 = vpow.pop %v1606
  %v1608 = vadd.f32 %v1601, 1.0
  %v1609 = vadd.f32 %v1603, 1.0
  %v1610 = vadd.f32 %v1605, 1.0
  %v1611 = vadd.f32 %v1607, 1.0
  %v1612 = vrcp.pop %v1608
  %v1613 = vmul.f32 %v1608, %v1612
  %v1614 = vsub.f32 1.0, %v1613
  %v1615 = vmul.f32 %v1612, %v1614
  %v1616 = vadd.f32 %v1612, %v1615
  %vm1617 = vweird.f32 %v1608
  %vm1618 = vweird.f32 %v1612
  %vm1619 = vmor %vm1617, %vm1618
  %v1620 = vsel %vm1619, %v1612, %v1616
  %v1621 = vand.u32 2147483647, %v1608
  %vm1622 = vcmp.eq.f32.partialorder %v1621, 8.507059e+37
  %v1623 = vand.u32 %v1608, 2147483648
  %v1624 = vor.u32 1.1754944e-38, %v1623
  %v1625 = vsel %vm1622, %v1624, %v1620
  %v1626 = vmul.f32 1.0, %v1625
  %v1627 = vrcp.pop %v1609
  %v1628 = vmul.f32 %v1609, %v1627
  %v1629 = vsub.f32 1.0, %v1628
  %v1630 = vmul.f32 %v1627, %v1629
  %v1631 = vadd.f32 %v1627, %v1630
  %vm1632 = vweird.f32 %v1609
  %vm1633 = vweird.f32 %v1627
  %vm1634 = vmor %vm1632, %vm1633
  %v1635 = vsel %vm1634, %v1627, %v1631
  %v1636 = vand.u32 2147483647, %v1609
  %vm1637 = vcmp.eq.f32.partialorder %v1636, 8.507059e+37
  %v1638 = vand.u32 %v1609, 2147483648
  %v1639 = vor.u32 1.1754944e-38, %v1638
  %v1640 = vsel %vm1637, %v1639, %v1635
  %v1641 = vmul.f32 1.0, %v1640
  %v1642 = vrcp.pop %v1610
  %v1643 = vmul.f32 %v1610, %v1642
  %v1644 = vsub.f32 1.0, %v1643
  %v1645 = vmul.f32 %v1642, %v1644
  %v1646 = vadd.f32 %v1642, %v1645
  %vm1647 = vweird.f32 %v1610
  %vm1648 = vweird.f32 %v1642
  %vm1649 = vmor %vm1647, %vm1648
  %v1650 = vsel %vm1649, %v1642, %v1646
  %v1651 = vand.u32 2147483647, %v1610
  %vm1652 = vcmp.eq.f32.partialorder %v1651, 8.507059e+37
  %v1653 = vand.u32 %v1610, 2147483648
  %v1654 = vor.u32 1.1754944e-38, %v1653
  %v1655 = vsel %vm1652, %v1654, %v1650
  %v1656 = vmul.f32 1.0, %v1655
  %v1657 = vrcp.pop %v1611
  %v1658 = vmul.f32 %v1611, %v1657
  %v1659 = vsub.f32 1.0, %v1658
  %v1660 = vmul.f32 %v1657, %v1659
  %v1661 = vadd.f32 %v1657, %v1660
  %vm1662 = vweird.f32 %v1611
  %vm1663 = vweird.f32 %v1657
  %vm1664 = vmor %vm1662, %vm1663
  %v1665 = vsel %vm1664, %v1657, %v1661
  %v1666 = vand.u32 2147483647, %v1611
  %vm1667 = vcmp.eq.f32.partialorder %v1666, 8.507059e+37
  %v1668 = vand.u32 %v1611, 2147483648
  %v1669 = vor.u32 1.1754944e-38, %v1668
  %v1670 = vsel %vm1667, %v1669, %v1665
  %v1671 = vmul.f32 1.0, %v1670
  %v1672 = vtanh.pop %v1584
  %v1673 = vtanh.pop %v1585
  %v1674 = vtanh.pop %v1586
  %v1675 = vtanh.pop %v1587
  %v1676 = vmul.f32 %v1626, %v1672
  %v1677 = vmul.f32 %v1641, %v1673
  %v1678 = vmul.f32 %v1656, %v1674
  %v1679 = vmul.f32 %v1671, %v1675
  %1680 = vst [vmem:[%s3] sm:$0xff] %v1676
  %1681 = vst [vmem:[%s3 + $0x20] sm:$0xff] %v1677
  %1682 = vst [vmem:[%s3 + $0x40] sm:$0xff] %v1678
  %1683 = vst [vmem:[%s3 + $0x60] sm:$0xff] %v1679
  %s1684 = scalar_lea.vmem [#allocation2], 8
  %v1685 = vld [vmem:[%s1684 + $0x180] sm:$0xff]
  %v1686 = vld [vmem:[%s1684 + $0x1a0] sm:$0xff]
  %v1687 = vld [vmem:[%s1684 + $0x1c0] sm:$0xff]
  %v1688 = vld [vmem:[%s1684 + $0x1e0] sm:$0xff]
  %v1689 = vtanh.pop %v1685
  %v1690 = vtanh.pop %v1686
  %v1691 = vtanh.pop %v1687
  %v1692 = vtanh.pop %v1688
  %v1693 = vld [vmem:[%s1684] sm:$0xff]
  %v1694 = vld [vmem:[%s1684 + $0x20] sm:$0xff]
  %v1695 = vld [vmem:[%s1684 + $0x40] sm:$0xff]
  %v1696 = vld [vmem:[%s1684 + $0x60] sm:$0xff]
  %v1697 = vxor.u32 %v1693, 2147483648
  %v1698 = vxor.u32 %v1694, 2147483648
  %v1699 = vxor.u32 %v1695, 2147483648
  %v1700 = vxor.u32 %v1696, 2147483648
  %v1701 = vmul.f32 %v1697, 1.442695
  %v1702 = vpow.pop %v1701
  %v1703 = vmul.f32 %v1698, 1.442695
  %v1704 = vpow.pop %v1703
  %v1705 = vmul.f32 %v1699, 1.442695
  %v1706 = vpow.pop %v1705
  %v1707 = vmul.f32 %v1700, 1.442695
  %v1708 = vpow.pop %v1707
  %v1709 = vadd.f32 %v1702, 1.0
  %v1710 = vadd.f32 %v1704, 1.0
  %v1711 = vadd.f32 %v1706, 1.0
  %v1712 = vadd.f32 %v1708, 1.0
  %v1713 = vrcp.pop %v1709
  %v1714 = vmul.f32 %v1709, %v1713
  %v1715 = vsub.f32 1.0, %v1714
  %v1716 = vmul.f32 %v1713, %v1715
  %v1717 = vadd.f32 %v1713, %v1716
  %vm1718 = vweird.f32 %v1709
  %vm1719 = vweird.f32 %v1713
  %vm1720 = vmor %vm1718, %vm1719
  %v1721 = vsel %vm1720, %v1713, %v1717
  %v1722 = vand.u32 2147483647, %v1709
  %vm1723 = vcmp.eq.f32.partialorder %v1722, 8.507059e+37
  %v1724 = vand.u32 %v1709, 2147483648
  %v1725 = vor.u32 1.1754944e-38, %v1724
  %v1726 = vsel %vm1723, %v1725, %v1721
  %v1727 = vmul.f32 1.0, %v1726
  %v1728 = vrcp.pop %v1710
  %v1729 = vmul.f32 %v1710, %v1728
  %v1730 = vsub.f32 1.0, %v1729
  %v1731 = vmul.f32 %v1728, %v1730
  %v1732 = vadd.f32 %v1728, %v1731
  %vm1733 = vweird.f32 %v1710
  %vm1734 = vweird.f32 %v1728
  %vm1735 = vmor %vm1733, %vm1734
  %v1736 = vsel %vm1735, %v1728, %v1732
  %v1737 = vand.u32 2147483647, %v1710
  %vm1738 = vcmp.eq.f32.partialorder %v1737, 8.507059e+37
  %v1739 = vand.u32 %v1710, 2147483648
  %v1740 = vor.u32 1.1754944e-38, %v1739
  %v1741 = vsel %vm1738, %v1740, %v1736
  %v1742 = vmul.f32 1.0, %v1741
  %v1743 = vrcp.pop %v1711
  %v1744 = vmul.f32 %v1711, %v1743
  %v1745 = vsub.f32 1.0, %v1744
  %v1746 = vmul.f32 %v1743, %v1745
  %v1747 = vadd.f32 %v1743, %v1746
  %vm1748 = vweird.f32 %v1711
  %vm1749 = vweird.f32 %v1743
  %vm1750 = vmor %vm1748, %vm1749
  %v1751 = vsel %vm1750, %v1743, %v1747
  %v1752 = vand.u32 2147483647, %v1711
  %vm1753 = vcmp.eq.f32.partialorder %v1752, 8.507059e+37
  %v1754 = vand.u32 %v1711, 2147483648
  %v1755 = vor.u32 1.1754944e-38, %v1754
  %v1756 = vsel %vm1753, %v1755, %v1751
  %v1757 = vmul.f32 1.0, %v1756
  %v1758 = vrcp.pop %v1712
  %v1759 = vmul.f32 %v1712, %v1758
  %v1760 = vsub.f32 1.0, %v1759
  %v1761 = vmul.f32 %v1758, %v1760
  %v1762 = vadd.f32 %v1758, %v1761
  %vm1763 = vweird.f32 %v1712
  %vm1764 = vweird.f32 %v1758
  %vm1765 = vmor %vm1763, %vm1764
  %v1766 = vsel %vm1765, %v1758, %v1762
  %v1767 = vand.u32 2147483647, %v1712
  %vm1768 = vcmp.eq.f32.partialorder %v1767, 8.507059e+37
  %v1769 = vand.u32 %v1712, 2147483648
  %v1770 = vor.u32 1.1754944e-38, %v1769
  %v1771 = vsel %vm1768, %v1770, %v1766
  %v1772 = vmul.f32 1.0, %v1771
  %v1773 = vmul.f32 %v1727, %v1689
  %v1774 = vmul.f32 %v1742, %v1690
  %v1775 = vmul.f32 %v1757, %v1691
  %v1776 = vmul.f32 %v1772, %v1692
  %v1777 = vld [vmem:[%s1684 + $0x80] sm:$0xff]
  %v1778 = vld [vmem:[%s1684 + $0xa0] sm:$0xff]
  %v1779 = vld [vmem:[%s1684 + $0xc0] sm:$0xff]
  %v1780 = vld [vmem:[%s1684 + $0xe0] sm:$0xff]
  %v1781 = vxor.u32 %v1777, 2147483648
  %v1782 = vxor.u32 %v1778, 2147483648
  %v1783 = vxor.u32 %v1779, 2147483648
  %v1784 = vxor.u32 %v1780, 2147483648
  %v1785 = vmul.f32 %v1781, 1.442695
  %v1786 = vpow.pop %v1785
  %v1787 = vmul.f32 %v1782, 1.442695
  %v1788 = vpow.pop %v1787
  %v1789 = vmul.f32 %v1783, 1.442695
  %v1790 = vpow.pop %v1789
  %v1791 = vmul.f32 %v1784, 1.442695
  %v1792 = vpow.pop %v1791
  %v1793 = vadd.f32 %v1786, 1.0
  %v1794 = vadd.f32 %v1788, 1.0
  %v1795 = vadd.f32 %v1790, 1.0
  %v1796 = vadd.f32 %v1792, 1.0
  %v1797 = vrcp.pop %v1793
  %v1798 = vmul.f32 %v1793, %v1797
  %v1799 = vsub.f32 1.0, %v1798
  %v1800 = vmul.f32 %v1797, %v1799
  %v1801 = vadd.f32 %v1797, %v1800
  %vm1802 = vweird.f32 %v1793
  %vm1803 = vweird.f32 %v1797
  %vm1804 = vmor %vm1802, %vm1803
  %v1805 = vsel %vm1804, %v1797, %v1801
  %v1806 = vand.u32 2147483647, %v1793
  %vm1807 = vcmp.eq.f32.partialorder %v1806, 8.507059e+37
  %v1808 = vand.u32 %v1793, 2147483648
  %v1809 = vor.u32 1.1754944e-38, %v1808
  %v1810 = vsel %vm1807, %v1809, %v1805
  %v1811 = vmul.f32 1.0, %v1810
  %v1812 = vrcp.pop %v1794
  %v1813 = vmul.f32 %v1794, %v1812
  %v1814 = vsub.f32 1.0, %v1813
  %v1815 = vmul.f32 %v1812, %v1814
  %v1816 = vadd.f32 %v1812, %v1815
  %vm1817 = vweird.f32 %v1794
  %vm1818 = vweird.f32 %v1812
  %vm1819 = vmor %vm1817, %vm1818
  %v1820 = vsel %vm1819, %v1812, %v1816
  %v1821 = vand.u32 2147483647, %v1794
  %vm1822 = vcmp.eq.f32.partialorder %v1821, 8.507059e+37
  %v1823 = vand.u32 %v1794, 2147483648
  %v1824 = vor.u32 1.1754944e-38, %v1823
  %v1825 = vsel %vm1822, %v1824, %v1820
  %v1826 = vmul.f32 1.0, %v1825
  %v1827 = vrcp.pop %v1795
  %v1828 = vmul.f32 %v1795, %v1827
  %v1829 = vsub.f32 1.0, %v1828
  %v1830 = vmul.f32 %v1827, %v1829
  %v1831 = vadd.f32 %v1827, %v1830
  %vm1832 = vweird.f32 %v1795
  %vm1833 = vweird.f32 %v1827
  %vm1834 = vmor %vm1832, %vm1833
  %v1835 = vsel %vm1834, %v1827, %v1831
  %v1836 = vand.u32 2147483647, %v1795
  %vm1837 = vcmp.eq.f32.partialorder %v1836, 8.507059e+37
  %v1838 = vand.u32 %v1795, 2147483648
  %v1839 = vor.u32 1.1754944e-38, %v1838
  %v1840 = vsel %vm1837, %v1839, %v1835
  %v1841 = vmul.f32 1.0, %v1840
  %v1842 = vrcp.pop %v1796
  %v1843 = vmul.f32 %v1796, %v1842
  %v1844 = vsub.f32 1.0, %v1843
  %v1845 = vmul.f32 %v1842, %v1844
  %v1846 = vadd.f32 %v1842, %v1845
  %vm1847 = vweird.f32 %v1796
  %vm1848 = vweird.f32 %v1842
  %vm1849 = vmor %vm1847, %vm1848
  %v1850 = vsel %vm1849, %v1842, %v1846
  %v1851 = vand.u32 2147483647, %v1796
  %vm1852 = vcmp.eq.f32.partialorder %v1851, 8.507059e+37
  %v1853 = vand.u32 %v1796, 2147483648
  %v1854 = vor.u32 1.1754944e-38, %v1853
  %v1855 = vsel %vm1852, %v1854, %v1850
  %v1856 = vmul.f32 1.0, %v1855
  %s1857 = scalar_lea.vmem %s2, 8
  %v1858 = vld [vmem:[%s1857] sm:$0xff]
  %v1859 = vld [vmem:[%s1857 + $0x20] sm:$0xff]
  %v1860 = vld [vmem:[%s1857 + $0x40] sm:$0xff]
  %v1861 = vld [vmem:[%s1857 + $0x60] sm:$0xff]
  %v1862 = vmul.f32 %v1811, %v1858
  %v1863 = vmul.f32 %v1826, %v1859
  %v1864 = vmul.f32 %v1841, %v1860
  %v1865 = vmul.f32 %v1856, %v1861
  %v1866 = vadd.f32 %v1862, %v1773
  %v1867 = vadd.f32 %v1863, %v1774
  %v1868 = vadd.f32 %v1864, %v1775
  %v1869 = vadd.f32 %v1865, %v1776
  %s1870 = scalar_lea.vmem %s4, 8
  %1871 = vst [vmem:[%s1870] sm:$0xff] %v1866
  %1872 = vst [vmem:[%s1870 + $0x20] sm:$0xff] %v1867
  %1873 = vst [vmem:[%s1870 + $0x40] sm:$0xff] %v1868
  %1874 = vst [vmem:[%s1870 + $0x60] sm:$0xff] %v1869
  %v1875 = vld [vmem:[%s1684 + $0x100] sm:$0xff]
  %v1876 = vld [vmem:[%s1684 + $0x120] sm:$0xff]
  %v1877 = vld [vmem:[%s1684 + $0x140] sm:$0xff]
  %v1878 = vld [vmem:[%s1684 + $0x160] sm:$0xff]
  %v1879 = vxor.u32 %v1875, 2147483648
  %v1880 = vxor.u32 %v1876, 2147483648
  %v1881 = vxor.u32 %v1877, 2147483648
  %v1882 = vxor.u32 %v1878, 2147483648
  %v1883 = vmul.f32 %v1879, 1.442695
  %v1884 = vpow.pop %v1883
  %v1885 = vmul.f32 %v1880, 1.442695
  %v1886 = vpow.pop %v1885
  %v1887 = vmul.f32 %v1881, 1.442695
  %v1888 = vpow.pop %v1887
  %v1889 = vmul.f32 %v1882, 1.442695
  %v1890 = vpow.pop %v1889
  %v1891 = vadd.f32 %v1884, 1.0
  %v1892 = vadd.f32 %v1886, 1.0
  %v1893 = vadd.f32 %v1888, 1.0
  %v1894 = vadd.f32 %v1890, 1.0
  %v1895 = vrcp.pop %v1891
  %v1896 = vmul.f32 %v1891, %v1895
  %v1897 = vsub.f32 1.0, %v1896
  %v1898 = vmul.f32 %v1895, %v1897
  %v1899 = vadd.f32 %v1895, %v1898
  %vm1900 = vweird.f32 %v1891
  %vm1901 = vweird.f32 %v1895
  %vm1902 = vmor %vm1900, %vm1901
  %v1903 = vsel %vm1902, %v1895, %v1899
  %v1904 = vand.u32 2147483647, %v1891
  %vm1905 = vcmp.eq.f32.partialorder %v1904, 8.507059e+37
  %v1906 = vand.u32 %v1891, 2147483648
  %v1907 = vor.u32 1.1754944e-38, %v1906
  %v1908 = vsel %vm1905, %v1907, %v1903
  %v1909 = vmul.f32 1.0, %v1908
  %v1910 = vrcp.pop %v1892
  %v1911 = vmul.f32 %v1892, %v1910
  %v1912 = vsub.f32 1.0, %v1911
  %v1913 = vmul.f32 %v1910, %v1912
  %v1914 = vadd.f32 %v1910, %v1913
  %vm1915 = vweird.f32 %v1892
  %vm1916 = vweird.f32 %v1910
  %vm1917 = vmor %vm1915, %vm1916
  %v1918 = vsel %vm1917, %v1910, %v1914
  %v1919 = vand.u32 2147483647, %v1892
  %vm1920 = vcmp.eq.f32.partialorder %v1919, 8.507059e+37
  %v1921 = vand.u32 %v1892, 2147483648
  %v1922 = vor.u32 1.1754944e-38, %v1921
  %v1923 = vsel %vm1920, %v1922, %v1918
  %v1924 = vmul.f32 1.0, %v1923
  %v1925 = vrcp.pop %v1893
  %v1926 = vmul.f32 %v1893, %v1925
  %v1927 = vsub.f32 1.0, %v1926
  %v1928 = vmul.f32 %v1925, %v1927
  %v1929 = vadd.f32 %v1925, %v1928
  %vm1930 = vweird.f32 %v1893
  %vm1931 = vweird.f32 %v1925
  %vm1932 = vmor %vm1930, %vm1931
  %v1933 = vsel %vm1932, %v1925, %v1929
  %v1934 = vand.u32 2147483647, %v1893
  %vm1935 = vcmp.eq.f32.partialorder %v1934, 8.507059e+37
  %v1936 = vand.u32 %v1893, 2147483648
  %v1937 = vor.u32 1.1754944e-38, %v1936
  %v1938 = vsel %vm1935, %v1937, %v1933
  %v1939 = vmul.f32 1.0, %v1938
  %v1940 = vrcp.pop %v1894
  %v1941 = vmul.f32 %v1894, %v1940
  %v1942 = vsub.f32 1.0, %v1941
  %v1943 = vmul.f32 %v1940, %v1942
  %v1944 = vadd.f32 %v1940, %v1943
  %vm1945 = vweird.f32 %v1894
  %vm1946 = vweird.f32 %v1940
  %vm1947 = vmor %vm1945, %vm1946
  %v1948 = vsel %vm1947, %v1940, %v1944
  %v1949 = vand.u32 2147483647, %v1894
  %vm1950 = vcmp.eq.f32.partialorder %v1949, 8.507059e+37
  %v1951 = vand.u32 %v1894, 2147483648
  %v1952 = vor.u32 1.1754944e-38, %v1951
  %v1953 = vsel %vm1950, %v1952, %v1948
  %v1954 = vmul.f32 1.0, %v1953
  %v1955 = vtanh.pop %v1866
  %v1956 = vtanh.pop %v1867
  %v1957 = vtanh.pop %v1868
  %v1958 = vtanh.pop %v1869
  %v1959 = vmul.f32 %v1909, %v1955
  %v1960 = vmul.f32 %v1924, %v1956
  %v1961 = vmul.f32 %v1939, %v1957
  %v1962 = vmul.f32 %v1954, %v1958
  %s1963 = scalar_lea.vmem %s3, 8
  %1964 = vst [vmem:[%s1963] sm:$0xff] %v1959
  %1965 = vst [vmem:[%s1963 + $0x20] sm:$0xff] %v1960
  %1966 = vst [vmem:[%s1963 + $0x40] sm:$0xff] %v1961
  %1967 = vst [vmem:[%s1963 + $0x60] sm:$0xff] %v1962
  %s1968 = scalar_lea.vmem [#allocation2], 16
  %v1969 = vld [vmem:[%s1968 + $0x180] sm:$0xff]
  %v1970 = vld [vmem:[%s1968 + $0x1a0] sm:$0xff]
  %v1971 = vld [vmem:[%s1968 + $0x1c0] sm:$0xff]
  %v1972 = vld [vmem:[%s1968 + $0x1e0] sm:$0xff]
  %v1973 = vtanh.pop %v1969
  %v1974 = vtanh.pop %v1970
  %v1975 = vtanh.pop %v1971
  %v1976 = vtanh.pop %v1972
  %v1977 = vld [vmem:[%s1968] sm:$0xff]
  %v1978 = vld [vmem:[%s1968 + $0x20] sm:$0xff]
  %v1979 = vld [vmem:[%s1968 + $0x40] sm:$0xff]
  %v1980 = vld [vmem:[%s1968 + $0x60] sm:$0xff]
  %v1981 = vxor.u32 %v1977, 2147483648
  %v1982 = vxor.u32 %v1978, 2147483648
  %v1983 = vxor.u32 %v1979, 2147483648
  %v1984 = vxor.u32 %v1980, 2147483648
  %v1985 = vmul.f32 %v1981, 1.442695
  %v1986 = vpow.pop %v1985
  %v1987 = vmul.f32 %v1982, 1.442695
  %v1988 = vpow.pop %v1987
  %v1989 = vmul.f32 %v1983, 1.442695
  %v1990 = vpow.pop %v1989
  %v1991 = vmul.f32 %v1984, 1.442695
  %v1992 = vpow.pop %v1991
  %v1993 = vadd.f32 %v1986, 1.0
  %v1994 = vadd.f32 %v1988, 1.0
  %v1995 = vadd.f32 %v1990, 1.0
  %v1996 = vadd.f32 %v1992, 1.0
  %v1997 = vrcp.pop %v1993
  %v1998 = vmul.f32 %v1993, %v1997
  %v1999 = vsub.f32 1.0, %v1998
  %v2000 = vmul.f32 %v1997, %v1999
  %v2001 = vadd.f32 %v1997, %v2000
  %vm2002 = vweird.f32 %v1993
  %vm2003 = vweird.f32 %v1997
  %vm2004 = vmor %vm2002, %vm2003
  %v2005 = vsel %vm2004, %v1997, %v2001
  %v2006 = vand.u32 2147483647, %v1993
  %vm2007 = vcmp.eq.f32.partialorder %v2006, 8.507059e+37
  %v2008 = vand.u32 %v1993, 2147483648
  %v2009 = vor.u32 1.1754944e-38, %v2008
  %v2010 = vsel %vm2007, %v2009, %v2005
  %v2011 = vmul.f32 1.0, %v2010
  %v2012 = vrcp.pop %v1994
  %v2013 = vmul.f32 %v1994, %v2012
  %v2014 = vsub.f32 1.0, %v2013
  %v2015 = vmul.f32 %v2012, %v2014
  %v2016 = vadd.f32 %v2012, %v2015
  %vm2017 = vweird.f32 %v1994
  %vm2018 = vweird.f32 %v2012
  %vm2019 = vmor %vm2017, %vm2018
  %v2020 = vsel %vm2019, %v2012, %v2016
  %v2021 = vand.u32 2147483647, %v1994
  %vm2022 = vcmp.eq.f32.partialorder %v2021, 8.507059e+37
  %v2023 = vand.u32 %v1994, 2147483648
  %v2024 = vor.u32 1.1754944e-38, %v2023
  %v2025 = vsel %vm2022, %v2024, %v2020
  %v2026 = vmul.f32 1.0, %v2025
  %v2027 = vrcp.pop %v1995
  %v2028 = vmul.f32 %v1995, %v2027
  %v2029 = vsub.f32 1.0, %v2028
  %v2030 = vmul.f32 %v2027, %v2029
  %v2031 = vadd.f32 %v2027, %v2030
  %vm2032 = vweird.f32 %v1995
  %vm2033 = vweird.f32 %v2027
  %vm2034 = vmor %vm2032, %vm2033
  %v2035 = vsel %vm2034, %v2027, %v2031
  %v2036 = vand.u32 2147483647, %v1995
  %vm2037 = vcmp.eq.f32.partialorder %v2036, 8.507059e+37
  %v2038 = vand.u32 %v1995, 2147483648
  %v2039 = vor.u32 1.1754944e-38, %v2038
  %v2040 = vsel %vm2037, %v2039, %v2035
  %v2041 = vmul.f32 1.0, %v2040
  %v2042 = vrcp.pop %v1996
  %v2043 = vmul.f32 %v1996, %v2042
  %v2044 = vsub.f32 1.0, %v2043
  %v2045 = vmul.f32 %v2042, %v2044
  %v2046 = vadd.f32 %v2042, %v2045
  %vm2047 = vweird.f32 %v1996
  %vm2048 = vweird.f32 %v2042
  %vm2049 = vmor %vm2047, %vm2048
  %v2050 = vsel %vm2049, %v2042, %v2046
  %v2051 = vand.u32 2147483647, %v1996
  %vm2052 = vcmp.eq.f32.partialorder %v2051, 8.507059e+37
  %v2053 = vand.u32 %v1996, 2147483648
  %v2054 = vor.u32 1.1754944e-38, %v2053
  %v2055 = vsel %vm2052, %v2054, %v2050
  %v2056 = vmul.f32 1.0, %v2055
  %v2057 = vmul.f32 %v2011, %v1973
  %v2058 = vmul.f32 %v2026, %v1974
  %v2059 = vmul.f32 %v2041, %v1975
  %v2060 = vmul.f32 %v2056, %v1976
  %v2061 = vld [vmem:[%s1968 + $0x80] sm:$0xff]
  %v2062 = vld [vmem:[%s1968 + $0xa0] sm:$0xff]
  %v2063 = vld [vmem:[%s1968 + $0xc0] sm:$0xff]
  %v2064 = vld [vmem:[%s1968 + $0xe0] sm:$0xff]
  %v2065 = vxor.u32 %v2061, 2147483648
  %v2066 = vxor.u32 %v2062, 2147483648
  %v2067 = vxor.u32 %v2063, 2147483648
  %v2068 = vxor.u32 %v2064, 2147483648
  %v2069 = vmul.f32 %v2065, 1.442695
  %v2070 = vpow.pop %v2069
  %v2071 = vmul.f32 %v2066, 1.442695
  %v2072 = vpow.pop %v2071
  %v2073 = vmul.f32 %v2067, 1.442695
  %v2074 = vpow.pop %v2073
  %v2075 = vmul.f32 %v2068, 1.442695
  %v2076 = vpow.pop %v2075
  %v2077 = vadd.f32 %v2070, 1.0
  %v2078 = vadd.f32 %v2072, 1.0
  %v2079 = vadd.f32 %v2074, 1.0
  %v2080 = vadd.f32 %v2076, 1.0
  %v2081 = vrcp.pop %v2077
  %v2082 = vmul.f32 %v2077, %v2081
  %v2083 = vsub.f32 1.0, %v2082
  %v2084 = vmul.f32 %v2081, %v2083
  %v2085 = vadd.f32 %v2081, %v2084
  %vm2086 = vweird.f32 %v2077
  %vm2087 = vweird.f32 %v2081
  %vm2088 = vmor %vm2086, %vm2087
  %v2089 = vsel %vm2088, %v2081, %v2085
  %v2090 = vand.u32 2147483647, %v2077
  %vm2091 = vcmp.eq.f32.partialorder %v2090, 8.507059e+37
  %v2092 = vand.u32 %v2077, 2147483648
  %v2093 = vor.u32 1.1754944e-38, %v2092
  %v2094 = vsel %vm2091, %v2093, %v2089
  %v2095 = vmul.f32 1.0, %v2094
  %v2096 = vrcp.pop %v2078
  %v2097 = vmul.f32 %v2078, %v2096
  %v2098 = vsub.f32 1.0, %v2097
  %v2099 = vmul.f32 %v2096, %v2098
  %v2100 = vadd.f32 %v2096, %v2099
  %vm2101 = vweird.f32 %v2078
  %vm2102 = vweird.f32 %v2096
  %vm2103 = vmor %vm2101, %vm2102
  %v2104 = vsel %vm2103, %v2096, %v2100
  %v2105 = vand.u32 2147483647, %v2078
  %vm2106 = vcmp.eq.f32.partialorder %v2105, 8.507059e+37
  %v2107 = vand.u32 %v2078, 2147483648
  %v2108 = vor.u32 1.1754944e-38, %v2107
  %v2109 = vsel %vm2106, %v2108, %v2104
  %v2110 = vmul.f32 1.0, %v2109
  %v2111 = vrcp.pop %v2079
  %v2112 = vmul.f32 %v2079, %v2111
  %v2113 = vsub.f32 1.0, %v2112
  %v2114 = vmul.f32 %v2111, %v2113
  %v2115 = vadd.f32 %v2111, %v2114
  %vm2116 = vweird.f32 %v2079
  %vm2117 = vweird.f32 %v2111
  %vm2118 = vmor %vm2116, %vm2117
  %v2119 = vsel %vm2118, %v2111, %v2115
  %v2120 = vand.u32 2147483647, %v2079
  %vm2121 = vcmp.eq.f32.partialorder %v2120, 8.507059e+37
  %v2122 = vand.u32 %v2079, 2147483648
  %v2123 = vor.u32 1.1754944e-38, %v2122
  %v2124 = vsel %vm2121, %v2123, %v2119
  %v2125 = vmul.f32 1.0, %v2124
  %v2126 = vrcp.pop %v2080
  %v2127 = vmul.f32 %v2080, %v2126
  %v2128 = vsub.f32 1.0, %v2127
  %v2129 = vmul.f32 %v2126, %v2128
  %v2130 = vadd.f32 %v2126, %v2129
  %vm2131 = vweird.f32 %v2080
  %vm2132 = vweird.f32 %v2126
  %vm2133 = vmor %vm2131, %vm2132
  %v2134 = vsel %vm2133, %v2126, %v2130
  %v2135 = vand.u32 2147483647, %v2080
  %vm2136 = vcmp.eq.f32.partialorder %v2135, 8.507059e+37
  %v2137 = vand.u32 %v2080, 2147483648
  %v2138 = vor.u32 1.1754944e-38, %v2137
  %v2139 = vsel %vm2136, %v2138, %v2134
  %v2140 = vmul.f32 1.0, %v2139
  %s2141 = scalar_lea.vmem %s2, 16
  %v2142 = vld [vmem:[%s2141] sm:$0xff]
  %v2143 = vld [vmem:[%s2141 + $0x20] sm:$0xff]
  %v2144 = vld [vmem:[%s2141 + $0x40] sm:$0xff]
  %v2145 = vld [vmem:[%s2141 + $0x60] sm:$0xff]
  %v2146 = vmul.f32 %v2095, %v2142
  %v2147 = vmul.f32 %v2110, %v2143
  %v2148 = vmul.f32 %v2125, %v2144
  %v2149 = vmul.f32 %v2140, %v2145
  %v2150 = vadd.f32 %v2146, %v2057
  %v2151 = vadd.f32 %v2147, %v2058
  %v2152 = vadd.f32 %v2148, %v2059
  %v2153 = vadd.f32 %v2149, %v2060
  %s2154 = scalar_lea.vmem %s4, 16
  %2155 = vst [vmem:[%s2154] sm:$0xff] %v2150
  %2156 = vst [vmem:[%s2154 + $0x20] sm:$0xff] %v2151
  %2157 = vst [vmem:[%s2154 + $0x40] sm:$0xff] %v2152
  %2158 = vst [vmem:[%s2154 + $0x60] sm:$0xff] %v2153
  %v2159 = vld [vmem:[%s1968 + $0x100] sm:$0xff]
  %v2160 = vld [vmem:[%s1968 + $0x120] sm:$0xff]
  %v2161 = vld [vmem:[%s1968 + $0x140] sm:$0xff]
  %v2162 = vld [vmem:[%s1968 + $0x160] sm:$0xff]
  %v2163 = vxor.u32 %v2159, 2147483648
  %v2164 = vxor.u32 %v2160, 2147483648
  %v2165 = vxor.u32 %v2161, 2147483648
  %v2166 = vxor.u32 %v2162, 2147483648
  %v2167 = vmul.f32 %v2163, 1.442695
  %v2168 = vpow.pop %v2167
  %v2169 = vmul.f32 %v2164, 1.442695
  %v2170 = vpow.pop %v2169
  %v2171 = vmul.f32 %v2165, 1.442695
  %v2172 = vpow.pop %v2171
  %v2173 = vmul.f32 %v2166, 1.442695
  %v2174 = vpow.pop %v2173
  %v2175 = vadd.f32 %v2168, 1.0
  %v2176 = vadd.f32 %v2170, 1.0
  %v2177 = vadd.f32 %v2172, 1.0
  %v2178 = vadd.f32 %v2174, 1.0
  %v2179 = vrcp.pop %v2175
  %v2180 = vmul.f32 %v2175, %v2179
  %v2181 = vsub.f32 1.0, %v2180
  %v2182 = vmul.f32 %v2179, %v2181
  %v2183 = vadd.f32 %v2179, %v2182
  %vm2184 = vweird.f32 %v2175
  %vm2185 = vweird.f32 %v2179
  %vm2186 = vmor %vm2184, %vm2185
  %v2187 = vsel %vm2186, %v2179, %v2183
  %v2188 = vand.u32 2147483647, %v2175
  %vm2189 = vcmp.eq.f32.partialorder %v2188, 8.507059e+37
  %v2190 = vand.u32 %v2175, 2147483648
  %v2191 = vor.u32 1.1754944e-38, %v2190
  %v2192 = vsel %vm2189, %v2191, %v2187
  %v2193 = vmul.f32 1.0, %v2192
  %v2194 = vrcp.pop %v2176
  %v2195 = vmul.f32 %v2176, %v2194
  %v2196 = vsub.f32 1.0, %v2195
  %v2197 = vmul.f32 %v2194, %v2196
  %v2198 = vadd.f32 %v2194, %v2197
  %vm2199 = vweird.f32 %v2176
  %vm2200 = vweird.f32 %v2194
  %vm2201 = vmor %vm2199, %vm2200
  %v2202 = vsel %vm2201, %v2194, %v2198
  %v2203 = vand.u32 2147483647, %v2176
  %vm2204 = vcmp.eq.f32.partialorder %v2203, 8.507059e+37
  %v2205 = vand.u32 %v2176, 2147483648
  %v2206 = vor.u32 1.1754944e-38, %v2205
  %v2207 = vsel %vm2204, %v2206, %v2202
  %v2208 = vmul.f32 1.0, %v2207
  %v2209 = vrcp.pop %v2177
  %v2210 = vmul.f32 %v2177, %v2209
  %v2211 = vsub.f32 1.0, %v2210
  %v2212 = vmul.f32 %v2209, %v2211
  %v2213 = vadd.f32 %v2209, %v2212
  %vm2214 = vweird.f32 %v2177
  %vm2215 = vweird.f32 %v2209
  %vm2216 = vmor %vm2214, %vm2215
  %v2217 = vsel %vm2216, %v2209, %v2213
  %v2218 = vand.u32 2147483647, %v2177
  %vm2219 = vcmp.eq.f32.partialorder %v2218, 8.507059e+37
  %v2220 = vand.u32 %v2177, 2147483648
  %v2221 = vor.u32 1.1754944e-38, %v2220
  %v2222 = vsel %vm2219, %v2221, %v2217
  %v2223 = vmul.f32 1.0, %v2222
  %v2224 = vrcp.pop %v2178
  %v2225 = vmul.f32 %v2178, %v2224
  %v2226 = vsub.f32 1.0, %v2225
  %v2227 = vmul.f32 %v2224, %v2226
  %v2228 = vadd.f32 %v2224, %v2227
  %vm2229 = vweird.f32 %v2178
  %vm2230 = vweird.f32 %v2224
  %vm2231 = vmor %vm2229, %vm2230
  %v2232 = vsel %vm2231, %v2224, %v2228
  %v2233 = vand.u32 2147483647, %v2178
  %vm2234 = vcmp.eq.f32.partialorder %v2233, 8.507059e+37
  %v2235 = vand.u32 %v2178, 2147483648
  %v2236 = vor.u32 1.1754944e-38, %v2235
  %v2237 = vsel %vm2234, %v2236, %v2232
  %v2238 = vmul.f32 1.0, %v2237
  %v2239 = vtanh.pop %v2150
  %v2240 = vtanh.pop %v2151
  %v2241 = vtanh.pop %v2152
  %v2242 = vtanh.pop %v2153
  %v2243 = vmul.f32 %v2193, %v2239
  %v2244 = vmul.f32 %v2208, %v2240
  %v2245 = vmul.f32 %v2223, %v2241
  %v2246 = vmul.f32 %v2238, %v2242
  %s2247 = scalar_lea.vmem %s3, 16
  %2248 = vst [vmem:[%s2247] sm:$0xff] %v2243
  %2249 = vst [vmem:[%s2247 + $0x20] sm:$0xff] %v2244
  %2250 = vst [vmem:[%s2247 + $0x40] sm:$0xff] %v2245
  %2251 = vst [vmem:[%s2247 + $0x60] sm:$0xff] %v2246
  %s2252 = scalar_lea.vmem [#allocation2], 24
  %v2253 = vld [vmem:[%s2252 + $0x180] sm:$0xff]
  %v2254 = vld [vmem:[%s2252 + $0x1a0] sm:$0xff]
  %v2255 = vld [vmem:[%s2252 + $0x1c0] sm:$0xff]
  %v2256 = vld [vmem:[%s2252 + $0x1e0] sm:$0xff]
  %v2257 = vtanh.pop %v2253
  %v2258 = vtanh.pop %v2254
  %v2259 = vtanh.pop %v2255
  %v2260 = vtanh.pop %v2256
  %v2261 = vld [vmem:[%s2252] sm:$0xff]
  %v2262 = vld [vmem:[%s2252 + $0x20] sm:$0xff]
  %v2263 = vld [vmem:[%s2252 + $0x40] sm:$0xff]
  %v2264 = vld [vmem:[%s2252 + $0x60] sm:$0xff]
  %v2265 = vxor.u32 %v2261, 2147483648
  %v2266 = vxor.u32 %v2262, 2147483648
  %v2267 = vxor.u32 %v2263, 2147483648
  %v2268 = vxor.u32 %v2264, 2147483648
  %v2269 = vmul.f32 %v2265, 1.442695
  %v2270 = vpow.pop %v2269
  %v2271 = vmul.f32 %v2266, 1.442695
  %v2272 = vpow.pop %v2271
  %v2273 = vmul.f32 %v2267, 1.442695
  %v2274 = vpow.pop %v2273
  %v2275 = vmul.f32 %v2268, 1.442695
  %v2276 = vpow.pop %v2275
  %v2277 = vadd.f32 %v2270, 1.0
  %v2278 = vadd.f32 %v2272, 1.0
  %v2279 = vadd.f32 %v2274, 1.0
  %v2280 = vadd.f32 %v2276, 1.0
  %v2281 = vrcp.pop %v2277
  %v2282 = vmul.f32 %v2277, %v2281
  %v2283 = vsub.f32 1.0, %v2282
  %v2284 = vmul.f32 %v2281, %v2283
  %v2285 = vadd.f32 %v2281, %v2284
  %vm2286 = vweird.f32 %v2277
  %vm2287 = vweird.f32 %v2281
  %vm2288 = vmor %vm2286, %vm2287
  %v2289 = vsel %vm2288, %v2281, %v2285
  %v2290 = vand.u32 2147483647, %v2277
  %vm2291 = vcmp.eq.f32.partialorder %v2290, 8.507059e+37
  %v2292 = vand.u32 %v2277, 2147483648
  %v2293 = vor.u32 1.1754944e-38, %v2292
  %v2294 = vsel %vm2291, %v2293, %v2289
  %v2295 = vmul.f32 1.0, %v2294
  %v2296 = vrcp.pop %v2278
  %v2297 = vmul.f32 %v2278, %v2296
  %v2298 = vsub.f32 1.0, %v2297
  %v2299 = vmul.f32 %v2296, %v2298
  %v2300 = vadd.f32 %v2296, %v2299
  %vm2301 = vweird.f32 %v2278
  %vm2302 = vweird.f32 %v2296
  %vm2303 = vmor %vm2301, %vm2302
  %v2304 = vsel %vm2303, %v2296, %v2300
  %v2305 = vand.u32 2147483647, %v2278
  %vm2306 = vcmp.eq.f32.partialorder %v2305, 8.507059e+37
  %v2307 = vand.u32 %v2278, 2147483648
  %v2308 = vor.u32 1.1754944e-38, %v2307
  %v2309 = vsel %vm2306, %v2308, %v2304
  %v2310 = vmul.f32 1.0, %v2309
  %v2311 = vrcp.pop %v2279
  %v2312 = vmul.f32 %v2279, %v2311
  %v2313 = vsub.f32 1.0, %v2312
  %v2314 = vmul.f32 %v2311, %v2313
  %v2315 = vadd.f32 %v2311, %v2314
  %vm2316 = vweird.f32 %v2279
  %vm2317 = vweird.f32 %v2311
  %vm2318 = vmor %vm2316, %vm2317
  %v2319 = vsel %vm2318, %v2311, %v2315
  %v2320 = vand.u32 2147483647, %v2279
  %vm2321 = vcmp.eq.f32.partialorder %v2320, 8.507059e+37
  %v2322 = vand.u32 %v2279, 2147483648
  %v2323 = vor.u32 1.1754944e-38, %v2322
  %v2324 = vsel %vm2321, %v2323, %v2319
  %v2325 = vmul.f32 1.0, %v2324
  %v2326 = vrcp.pop %v2280
  %v2327 = vmul.f32 %v2280, %v2326
  %v2328 = vsub.f32 1.0, %v2327
  %v2329 = vmul.f32 %v2326, %v2328
  %v2330 = vadd.f32 %v2326, %v2329
  %vm2331 = vweird.f32 %v2280
  %vm2332 = vweird.f32 %v2326
  %vm2333 = vmor %vm2331, %vm2332
  %v2334 = vsel %vm2333, %v2326, %v2330
  %v2335 = vand.u32 2147483647, %v2280
  %vm2336 = vcmp.eq.f32.partialorder %v2335, 8.507059e+37
  %v2337 = vand.u32 %v2280, 2147483648
  %v2338 = vor.u32 1.1754944e-38, %v2337
  %v2339 = vsel %vm2336, %v2338, %v2334
  %v2340 = vmul.f32 1.0, %v2339
  %v2341 = vmul.f32 %v2295, %v2257
  %v2342 = vmul.f32 %v2310, %v2258
  %v2343 = vmul.f32 %v2325, %v2259
  %v2344 = vmul.f32 %v2340, %v2260
  %v2345 = vld [vmem:[%s2252 + $0x80] sm:$0xff]
  %v2346 = vld [vmem:[%s2252 + $0xa0] sm:$0xff]
  %v2347 = vld [vmem:[%s2252 + $0xc0] sm:$0xff]
  %v2348 = vld [vmem:[%s2252 + $0xe0] sm:$0xff]
  %v2349 = vxor.u32 %v2345, 2147483648
  %v2350 = vxor.u32 %v2346, 2147483648
  %v2351 = vxor.u32 %v2347, 2147483648
  %v2352 = vxor.u32 %v2348, 2147483648
  %v2353 = vmul.f32 %v2349, 1.442695
  %v2354 = vpow.pop %v2353
  %v2355 = vmul.f32 %v2350, 1.442695
  %v2356 = vpow.pop %v2355
  %v2357 = vmul.f32 %v2351, 1.442695
  %v2358 = vpow.pop %v2357
  %v2359 = vmul.f32 %v2352, 1.442695
  %v2360 = vpow.pop %v2359
  %v2361 = vadd.f32 %v2354, 1.0
  %v2362 = vadd.f32 %v2356, 1.0
  %v2363 = vadd.f32 %v2358, 1.0
  %v2364 = vadd.f32 %v2360, 1.0
  %v2365 = vrcp.pop %v2361
  %v2366 = vmul.f32 %v2361, %v2365
  %v2367 = vsub.f32 1.0, %v2366
  %v2368 = vmul.f32 %v2365, %v2367
  %v2369 = vadd.f32 %v2365, %v2368
  %vm2370 = vweird.f32 %v2361
  %vm2371 = vweird.f32 %v2365
  %vm2372 = vmor %vm2370, %vm2371
  %v2373 = vsel %vm2372, %v2365, %v2369
  %v2374 = vand.u32 2147483647, %v2361
  %vm2375 = vcmp.eq.f32.partialorder %v2374, 8.507059e+37
  %v2376 = vand.u32 %v2361, 2147483648
  %v2377 = vor.u32 1.1754944e-38, %v2376
  %v2378 = vsel %vm2375, %v2377, %v2373
  %v2379 = vmul.f32 1.0, %v2378
  %v2380 = vrcp.pop %v2362
  %v2381 = vmul.f32 %v2362, %v2380
  %v2382 = vsub.f32 1.0, %v2381
  %v2383 = vmul.f32 %v2380, %v2382
  %v2384 = vadd.f32 %v2380, %v2383
  %vm2385 = vweird.f32 %v2362
  %vm2386 = vweird.f32 %v2380
  %vm2387 = vmor %vm2385, %vm2386
  %v2388 = vsel %vm2387, %v2380, %v2384
  %v2389 = vand.u32 2147483647, %v2362
  %vm2390 = vcmp.eq.f32.partialorder %v2389, 8.507059e+37
  %v2391 = vand.u32 %v2362, 2147483648
  %v2392 = vor.u32 1.1754944e-38, %v2391
  %v2393 = vsel %vm2390, %v2392, %v2388
  %v2394 = vmul.f32 1.0, %v2393
  %v2395 = vrcp.pop %v2363
  %v2396 = vmul.f32 %v2363, %v2395
  %v2397 = vsub.f32 1.0, %v2396
  %v2398 = vmul.f32 %v2395, %v2397
  %v2399 = vadd.f32 %v2395, %v2398
  %vm2400 = vweird.f32 %v2363
  %vm2401 = vweird.f32 %v2395
  %vm2402 = vmor %vm2400, %vm2401
  %v2403 = vsel %vm2402, %v2395, %v2399
  %v2404 = vand.u32 2147483647, %v2363
  %vm2405 = vcmp.eq.f32.partialorder %v2404, 8.507059e+37
  %v2406 = vand.u32 %v2363, 2147483648
  %v2407 = vor.u32 1.1754944e-38, %v2406
  %v2408 = vsel %vm2405, %v2407, %v2403
  %v2409 = vmul.f32 1.0, %v2408
  %v2410 = vrcp.pop %v2364
  %v2411 = vmul.f32 %v2364, %v2410
  %v2412 = vsub.f32 1.0, %v2411
  %v2413 = vmul.f32 %v2410, %v2412
  %v2414 = vadd.f32 %v2410, %v2413
  %vm2415 = vweird.f32 %v2364
  %vm2416 = vweird.f32 %v2410
  %vm2417 = vmor %vm2415, %vm2416
  %v2418 = vsel %vm2417, %v2410, %v2414
  %v2419 = vand.u32 2147483647, %v2364
  %vm2420 = vcmp.eq.f32.partialorder %v2419, 8.507059e+37
  %v2421 = vand.u32 %v2364, 2147483648
  %v2422 = vor.u32 1.1754944e-38, %v2421
  %v2423 = vsel %vm2420, %v2422, %v2418
  %v2424 = vmul.f32 1.0, %v2423
  %s2425 = scalar_lea.vmem %s2, 24
  %v2426 = vld [vmem:[%s2425] sm:$0xff]
  %v2427 = vld [vmem:[%s2425 + $0x20] sm:$0xff]
  %v2428 = vld [vmem:[%s2425 + $0x40] sm:$0xff]
  %v2429 = vld [vmem:[%s2425 + $0x60] sm:$0xff]
  %v2430 = vmul.f32 %v2379, %v2426
  %v2431 = vmul.f32 %v2394, %v2427
  %v2432 = vmul.f32 %v2409, %v2428
  %v2433 = vmul.f32 %v2424, %v2429
  %v2434 = vadd.f32 %v2430, %v2341
  %v2435 = vadd.f32 %v2431, %v2342
  %v2436 = vadd.f32 %v2432, %v2343
  %v2437 = vadd.f32 %v2433, %v2344
  %s2438 = scalar_lea.vmem %s4, 24
  %2439 = vst [vmem:[%s2438] sm:$0xff] %v2434
  %2440 = vst [vmem:[%s2438 + $0x20] sm:$0xff] %v2435
  %2441 = vst [vmem:[%s2438 + $0x40] sm:$0xff] %v2436
  %2442 = vst [vmem:[%s2438 + $0x60] sm:$0xff] %v2437
  %v2443 = vld [vmem:[%s2252 + $0x100] sm:$0xff]
  %v2444 = vld [vmem:[%s2252 + $0x120] sm:$0xff]
  %v2445 = vld [vmem:[%s2252 + $0x140] sm:$0xff]
  %v2446 = vld [vmem:[%s2252 + $0x160] sm:$0xff]
  %v2447 = vxor.u32 %v2443, 2147483648
  %v2448 = vxor.u32 %v2444, 2147483648
  %v2449 = vxor.u32 %v2445, 2147483648
  %v2450 = vxor.u32 %v2446, 2147483648
  %v2451 = vmul.f32 %v2447, 1.442695
  %v2452 = vpow.pop %v2451
  %v2453 = vmul.f32 %v2448, 1.442695
  %v2454 = vpow.pop %v2453
  %v2455 = vmul.f32 %v2449, 1.442695
  %v2456 = vpow.pop %v2455
  %v2457 = vmul.f32 %v2450, 1.442695
  %v2458 = vpow.pop %v2457
  %v2459 = vadd.f32 %v2452, 1.0
  %v2460 = vadd.f32 %v2454, 1.0
  %v2461 = vadd.f32 %v2456, 1.0
  %v2462 = vadd.f32 %v2458, 1.0
  %v2463 = vrcp.pop %v2459
  %v2464 = vmul.f32 %v2459, %v2463
  %v2465 = vsub.f32 1.0, %v2464
  %v2466 = vmul.f32 %v2463, %v2465
  %v2467 = vadd.f32 %v2463, %v2466
  %vm2468 = vweird.f32 %v2459
  %vm2469 = vweird.f32 %v2463
  %vm2470 = vmor %vm2468, %vm2469
  %v2471 = vsel %vm2470, %v2463, %v2467
  %v2472 = vand.u32 2147483647, %v2459
  %vm2473 = vcmp.eq.f32.partialorder %v2472, 8.507059e+37
  %v2474 = vand.u32 %v2459, 2147483648
  %v2475 = vor.u32 1.1754944e-38, %v2474
  %v2476 = vsel %vm2473, %v2475, %v2471
  %v2477 = vmul.f32 1.0, %v2476
  %v2478 = vrcp.pop %v2460
  %v2479 = vmul.f32 %v2460, %v2478
  %v2480 = vsub.f32 1.0, %v2479
  %v2481 = vmul.f32 %v2478, %v2480
  %v2482 = vadd.f32 %v2478, %v2481
  %vm2483 = vweird.f32 %v2460
  %vm2484 = vweird.f32 %v2478
  %vm2485 = vmor %vm2483, %vm2484
  %v2486 = vsel %vm2485, %v2478, %v2482
  %v2487 = vand.u32 2147483647, %v2460
  %vm2488 = vcmp.eq.f32.partialorder %v2487, 8.507059e+37
  %v2489 = vand.u32 %v2460, 2147483648
  %v2490 = vor.u32 1.1754944e-38, %v2489
  %v2491 = vsel %vm2488, %v2490, %v2486
  %v2492 = vmul.f32 1.0, %v2491
  %v2493 = vrcp.pop %v2461
  %v2494 = vmul.f32 %v2461, %v2493
  %v2495 = vsub.f32 1.0, %v2494
  %v2496 = vmul.f32 %v2493, %v2495
  %v2497 = vadd.f32 %v2493, %v2496
  %vm2498 = vweird.f32 %v2461
  %vm2499 = vweird.f32 %v2493
  %vm2500 = vmor %vm2498, %vm2499
  %v2501 = vsel %vm2500, %v2493, %v2497
  %v2502 = vand.u32 2147483647, %v2461
  %vm2503 = vcmp.eq.f32.partialorder %v2502, 8.507059e+37
  %v2504 = vand.u32 %v2461, 2147483648
  %v2505 = vor.u32 1.1754944e-38, %v2504
  %v2506 = vsel %vm2503, %v2505, %v2501
  %v2507 = vmul.f32 1.0, %v2506
  %v2508 = vrcp.pop %v2462
  %v2509 = vmul.f32 %v2462, %v2508
  %v2510 = vsub.f32 1.0, %v2509
  %v2511 = vmul.f32 %v2508, %v2510
  %v2512 = vadd.f32 %v2508, %v2511
  %vm2513 = vweird.f32 %v2462
  %vm2514 = vweird.f32 %v2508
  %vm2515 = vmor %vm2513, %vm2514
  %v2516 = vsel %vm2515, %v2508, %v2512
  %v2517 = vand.u32 2147483647, %v2462
  %vm2518 = vcmp.eq.f32.partialorder %v2517, 8.507059e+37
  %v2519 = vand.u32 %v2462, 2147483648
  %v2520 = vor.u32 1.1754944e-38, %v2519
  %v2521 = vsel %vm2518, %v2520, %v2516
  %v2522 = vmul.f32 1.0, %v2521
  %v2523 = vtanh.pop %v2434
  %v2524 = vtanh.pop %v2435
  %v2525 = vtanh.pop %v2436
  %v2526 = vtanh.pop %v2437
  %v2527 = vmul.f32 %v2477, %v2523
  %v2528 = vmul.f32 %v2492, %v2524
  %v2529 = vmul.f32 %v2507, %v2525
  %v2530 = vmul.f32 %v2522, %v2526
  %s2531 = scalar_lea.vmem %s3, 24
  %2532 = vst [vmem:[%s2531] sm:$0xff] %v2527
  %2533 = vst [vmem:[%s2531 + $0x20] sm:$0xff] %v2528
  %2534 = vst [vmem:[%s2531 + $0x40] sm:$0xff] %v2529
  %2535 = vst [vmem:[%s2531 + $0x60] sm:$0xff] %v2530
  // Predicated region
  $region14: #{convlstm_cell_forward.1} parent=0 // pred_check
    _
  $region15: #{convlstm_cell_forward.1} parent=0 // pred_check_branch
    %2537 = sbr.rel (0) target = $region17
  $region16: #{convlstm_cell_forward.1} parent=0 // pred_region
    _
  $region17: #{convlstm_cell_forward.1} parent=0 // pred_fallthru
    _
  // Predicated region
  $region18: #{convlstm_cell_forward.1} parent=0 // pred_check
    _
  $region19: #{convlstm_cell_forward.1} parent=0 // pred_check_branch
    %2539 = sbr.rel (0) target = $region21
  $region20: #{convlstm_cell_forward.1} parent=0 // pred_region
    _
  $region21: #{convlstm_cell_forward.1} parent=0 // pred_fallthru
    _
  // Predicated region
  $region22: #{convlstm_cell_forward.1} parent=0 // pred_check
    _
  $region23: #{convlstm_cell_forward.1} parent=0 // pred_check_branch
    %2541 = sbr.rel (0) target = $region25
  $region24: #{convlstm_cell_forward.1} parent=0 // pred_region
    _
  $region25: #{convlstm_cell_forward.1} parent=0 // pred_fallthru
    _
  // Predicated region
  $region26: #{convlstm_cell_forward.1} parent=0 // pred_check
    _
  $region27: #{convlstm_cell_forward.1} parent=0 // pred_check_branch
    %2543 = sbr.rel (0) target = $region29
  $region28: #{convlstm_cell_forward.1} parent=0 // pred_region
    _
  $region29: #{convlstm_cell_forward.1} parent=0 // pred_fallthru
    _

</llo_original>
